<compile_context>
chip_gen: v7x
topology: tpu7x:2x2x1
jax: 0.10.0
libtpu: 0.0.40
codegen_flags: <defaults>
</compile_context>

<pallas_src>
import math
from functools import partial

import numpy as np
import jax
import jax.numpy as jnp
from jax.experimental import pallas as pl
from jax.experimental.pallas import tpu as pltpu

NEG_INF = -10000000000.0  # matches torch masked_fill(-1e10)


def _khead_attn_cos_kernel(embs_ref, mask_ref, wm_ref, bm_ref, wq_ref, bq_ref,
                           wk_ref, bk_ref, o_ref, *, head_num, d_k, threshold):
    B, S, D = embs_ref.shape
    H = head_num
    f32 = jnp.float32

    embs2d = embs_ref[...].reshape(B * S, D)                      # leading-dim merge (trivial)

    # --- projections: mapping, then Q and K from the mapped embeddings (D-deep MXU) ---
    mapped = jnp.dot(embs2d, wm_ref[...], preferred_element_type=f32) + bm_ref[...]
    q2d = jnp.dot(mapped, wq_ref[...], preferred_element_type=f32) + bq_ref[...]
    k2d = jnp.dot(mapped, wk_ref[...], preferred_element_type=f32) + bk_ref[...]

    # --- 0/1 head-block indicator matrices, built with iota (no int division) ---
    # hm_hd[h, d] = 1 iff feature d belongs to head h ; hm_dh is its transpose.
    ih = jax.lax.broadcasted_iota(jnp.int32, (H, D), 0)
    idd = jax.lax.broadcasted_iota(jnp.int32, (H, D), 1)
    lo = ih * d_k
    hm_hd = ((idd >= lo) & (idd < lo + d_k)).astype(f32)           # (H, D)

    ih2 = jax.lax.broadcasted_iota(jnp.int32, (D, H), 1)
    idd2 = jax.lax.broadcasted_iota(jnp.int32, (D, H), 0)
    lo2 = ih2 * d_k
    hm_dh = ((idd2 >= lo2) & (idd2 < lo2 + d_k)).astype(f32)       # (D, H)

    # --- per-head inverse norms (rsqrt on the squared norm == 1/max(norm, 1e-8)) ---
    sumsq_h = jnp.dot(mapped * mapped, hm_dh, preferred_element_type=f32)   # (B*S, H)
    inv_h = jax.lax.rsqrt(jnp.maximum(sumsq_h, 1e-16))
    inv_full = jnp.dot(inv_h, hm_hd, preferred_element_type=f32)            # (B*S, D)
    sem_n = mapped * inv_full                                                # per-head normalized

    sem3 = sem_n.reshape(B, S, D)
    q3 = q2d.reshape(B, S, D)
    k3 = k2d.reshape(B, S, D)

    # --- head-stacked LEFT operands: row h*S+i carries head-h-masked features of token i ---
    sem_st = (sem3[:, None, :, :] * hm_hd[None, :, None, :]).reshape(B, H * S, D)
    q_st = (q3[:, None, :, :] * hm_hd[None, :, None, :]).reshape(B, H * S, D)

    # --- ONE batched contraction per score type, depth D, all heads at once ---
    cos = jnp.einsum('bpd,bjd->bpj', sem_st, sem3,
                     preferred_element_type=f32)                   # (B, H*S, S)
    scores = jnp.einsum('bpd,bjd->bpj', q_st, k3,
                        preferred_element_type=f32) * (1.0 / math.sqrt(d_k))

    # --- mask (int8, 1 = masked), broadcast over heads once ---
    maskf = mask_ref[...].astype(f32)                              # (B, S, S)
    mask_bh = jnp.broadcast_to(maskf[:, None], (B, H, S, S)).reshape(B, H * S, S)
    mpred = mask_bh > 0.5

    # cosine adjacency: masked entries zeroed before threshold (matches torch exactly)
    cos_adj = (jnp.where(mpred, 0.0, cos) > threshold).astype(f32)

    # masked softmax attention
    s = jnp.where(mpred, NEG_INF, scores)
    e = jnp.exp(s - jnp.max(s, axis=-1, keepdims=True))
    p = e * pl.reciprocal(jnp.sum(e, axis=-1, keepdims=True), approx=True)
    # zero fully-masked query rows (torch: p_attn * (~score_mask[..., 0:1]))
    row_keep = 1.0 - mask_bh[:, :, 0:1]
    p = p * row_keep

    o_ref[...] = cos_adj * p                                       # (B, H*S, S)


def khead_attn_cos_similarity(params, embs, score_mask, *, head_num, threshold):
    """embs: (B,S,D) f32, score_mask: (B,S,S) bool (True = masked).
    Returns K_head_attn_cosine: (B, head_num, S, S) f32."""
    B, S, D = embs.shape
    assert D % head_num == 0
    d_k = D // head_num

    mask_i8 = score_mask.astype(jnp.int8)    # 1 byte/elem instead of 4 (review #5)

    kernel = partial(_khead_attn_cos_kernel, head_num=head_num, d_k=d_k,
                     threshold=float(threshold))
    out = pl.pallas_call(
        kernel,
        out_shape=jax.ShapeDtypeStruct((B, head_num * S, S), jnp.float32),
        grid=(1,),
        in_specs=[
            pl.BlockSpec((B, S, D), lambda i: (0, 0, 0)),      # embs
            pl.BlockSpec((B, S, S), lambda i: (0, 0, 0)),      # mask (int8)
            pl.BlockSpec((D, D), lambda i: (0, 0)),            # map_w
            pl.BlockSpec((1, D), lambda i: (0, 0)),            # map_b
            pl.BlockSpec((D, D), lambda i: (0, 0)),            # q_w
            pl.BlockSpec((1, D), lambda i: (0, 0)),            # q_b
            pl.BlockSpec((D, D), lambda i: (0, 0)),            # k_w
            pl.BlockSpec((1, D), lambda i: (0, 0)),            # k_b
        ],
        out_specs=pl.BlockSpec((B, head_num * S, S), lambda i: (0, 0, 0)),
        compiler_params=pltpu.CompilerParams(dimension_semantics=("arbitrary",)),
    )(embs, mask_i8,
      params['map_w'], params['map_b'].reshape(1, D),
      params['q_w'], params['q_b'].reshape(1, D),
      params['k_w'], params['k_b'].reshape(1, D))

    # pure reshape (no transpose, no HBM copy): (B, H*S, S) -> (B, H, S, S)
    return out.reshape(B, head_num, S, S)


# ---------------------- pure-JAX reference (torch semantics) ----------------------

def reference_forward(params, embs, score_mask, head_num, threshold):
    B, S, D = embs.shape
    d_k = D // head_num
    maskf = score_mask.astype(jnp.float32)[:, None]             # (B,1,S,S)

    mapped = embs @ params['map_w'] + params['map_b']

    def heads(x):
        return x.reshape(B, S, head_num, d_k).transpose(0, 2, 1, 3)

    sem = heads(mapped)
    nrm = jnp.sqrt(jnp.sum(sem * sem, axis=-1, keepdims=True))
    sem_n = sem / jnp.maximum(nrm, 1e-8)
    cos = jnp.einsum('bhid,bhjd->bhij', sem_n, sem_n)
    cos = cos * (1.0 - maskf)
    cos_adj = (cos > threshold).astype(jnp.float32)

    q = heads(mapped @ params['q_w'] + params['q_b'])
    k = heads(mapped @ params['k_w'] + params['k_b'])
    s = jnp.einsum('bhid,bhjd->bhij', q, k) / math.sqrt(d_k)
    s = jnp.where(maskf > 0.5, NEG_INF, s)
    p = jax.nn.softmax(s, axis=-1)
    p = p * (1.0 - maskf[:, :, :, 0:1])
    return cos_adj * p, cos


if __name__ == "__main__":
    head_num = 4
    input_dim = 64          # 2 * hidden_dim (hidden_dim = 32)
    threshold = 0.1
    B, S = 2, 8

    key = jax.random.PRNGKey(0)
    k_embs, k_wm, k_bm, k_wq, k_bq, k_wk, k_bk = jax.random.split(key, 7)

    params = {
        'map_w': (0.1 * jax.random.normal(k_wm, (input_dim, input_dim))).astype(jnp.float32),
        'map_b': (0.1 * jax.random.normal(k_bm, (input_dim,))).astype(jnp.float32),
        'q_w':   (0.1 * jax.random.normal(k_wq, (input_dim, input_dim))).astype(jnp.float32),
        'q_b':   (0.1 * jax.random.normal(k_bq, (input_dim,))).astype(jnp.float32),
        'k_w':   (0.1 * jax.random.normal(k_wk, (input_dim, input_dim))).astype(jnp.float32),
        'k_b':   (0.1 * jax.random.normal(k_bk, (input_dim,))).astype(jnp.float32),
    }
    embs = (0.5 * jax.random.normal(k_embs, (B, S, input_dim))).astype(jnp.float32)

    # deterministic padding mask: batch 0 uses all 8 tokens, batch 1 uses 6
    lengths = jnp.array([S, S - 2], dtype=jnp.int32)
    valid = jnp.arange(S)[None, :] < lengths[:, None]            # (B,S)
    score_mask = ~(valid[:, :, None] & valid[:, None, :])        # (B,S,S) bool, True=masked

    fwd = jax.jit(partial(khead_attn_cos_similarity,
                          head_num=head_num, threshold=threshold))
    out = fwd(params, embs, score_mask)
    jax.block_until_ready(out)
    assert out.shape == (B, head_num, S, S)

    # correctness check vs pure-JAX reference (skip entries sitting exactly on the
    # cosine threshold boundary, where a 1-ulp accumulation-order difference could
    # flip the 0/1 adjacency)
    out_ref, cos_ref = reference_forward(params, embs, score_mask, head_num, threshold)
    stable = np.abs(np.asarray(cos_ref) - threshold) > 1e-4
    diff = np.where(stable, np.asarray(out) - np.asarray(out_ref), 0.0)
    assert np.max(np.abs(diff)) < 5e-3, float(np.max(np.abs(diff)))

    print("KERNEL_OK")
</pallas_src>

<mosaic_0001>
module attributes {stable_mosaic.version = 11 : i64} {
  func.func @_khead_attn_cos_kernel(%arg0: i32, %arg1: memref<2x8x64xf32, #tpu.memory_space<vmem>>, %arg2: memref<2x8x8xi8, #tpu.memory_space<vmem>>, %arg3: memref<64x64xf32, #tpu.memory_space<vmem>>, %arg4: memref<1x64xf32, #tpu.memory_space<vmem>>, %arg5: memref<64x64xf32, #tpu.memory_space<vmem>>, %arg6: memref<1x64xf32, #tpu.memory_space<vmem>>, %arg7: memref<64x64xf32, #tpu.memory_space<vmem>>, %arg8: memref<1x64xf32, #tpu.memory_space<vmem>>, %arg9: memref<2x32x8xf32, #tpu.memory_space<vmem>>) attributes {dimension_semantics = [#tpu.dimension_semantics<arbitrary>], iteration_bounds = array<i64: 1>, scalar_prefetch = 0 : i64, scratch_operands = 0 : i64, tpu.core_type = #tpu.core_type<tc>, window_params = [{pipeline_mode = #tpu.pipeline_mode<synchronous>, transform_indices = @transform_0, window_bounds = array<i64: 2, 8, 64>}, {pipeline_mode = #tpu.pipeline_mode<synchronous>, transform_indices = @transform_1, window_bounds = array<i64: 2, 8, 8>}, {pipeline_mode = #tpu.pipeline_mode<synchronous>, transform_indices = @transform_2, window_bounds = array<i64: 64, 64>}, {pipeline_mode = #tpu.pipeline_mode<synchronous>, transform_indices = @transform_3, window_bounds = array<i64: 1, 64>}, {pipeline_mode = #tpu.pipeline_mode<synchronous>, transform_indices = @transform_4, window_bounds = array<i64: 64, 64>}, {pipeline_mode = #tpu.pipeline_mode<synchronous>, transform_indices = @transform_5, window_bounds = array<i64: 1, 64>}, {pipeline_mode = #tpu.pipeline_mode<synchronous>, transform_indices = @transform_6, window_bounds = array<i64: 64, 64>}, {pipeline_mode = #tpu.pipeline_mode<synchronous>, transform_indices = @transform_7, window_bounds = array<i64: 1, 64>}, {pipeline_mode = #tpu.pipeline_mode<synchronous>, transform_indices = @transform_8, window_bounds = array<i64: 2, 32, 8>}]} {
    %c0 = arith.constant 0 : index
    %c0_0 = arith.constant 0 : index
    %c0_1 = arith.constant 0 : index
    %0 = vector.load %arg1[%c0, %c0_0, %c0_1] : memref<2x8x64xf32, #tpu.memory_space<vmem>>, vector<2x8x64xf32>
    %1 = vector.shape_cast %0 : vector<2x8x64xf32> to vector<16x64xf32>
    %c0_2 = arith.constant 0 : index
    %c0_3 = arith.constant 0 : index
    %2 = vector.load %arg3[%c0_2, %c0_3] : memref<64x64xf32, #tpu.memory_space<vmem>>, vector<64x64xf32>
    %cst = arith.constant dense<0.000000e+00> : vector<16x64xf32>
    %3 = tpu.matmul %1, %2, %cst {dimension_numbers = #tpu.dot_dimension_numbers<[1], [0], [0], [1], [0, 0, 1, 1], [], []>} : vector<16x64xf32>, vector<64x64xf32>, vector<16x64xf32> -> vector<16x64xf32>
    %c0_4 = arith.constant 0 : index
    %c0_5 = arith.constant 0 : index
    %4 = vector.load %arg4[%c0_4, %c0_5] : memref<1x64xf32, #tpu.memory_space<vmem>>, vector<1x64xf32>
    %5 = vector.broadcast %4 : vector<1x64xf32> to vector<16x64xf32>
    %6 = arith.addf %3, %5 : vector<16x64xf32>
    %c0_6 = arith.constant 0 : index
    %c0_7 = arith.constant 0 : index
    %7 = vector.load %arg5[%c0_6, %c0_7] : memref<64x64xf32, #tpu.memory_space<vmem>>, vector<64x64xf32>
    %cst_8 = arith.constant dense<0.000000e+00> : vector<16x64xf32>
    %8 = tpu.matmul %6, %7, %cst_8 {dimension_numbers = #tpu.dot_dimension_numbers<[1], [0], [0], [1], [0, 0, 1, 1], [], []>} : vector<16x64xf32>, vector<64x64xf32>, vector<16x64xf32> -> vector<16x64xf32>
    %c0_9 = arith.constant 0 : index
    %c0_10 = arith.constant 0 : index
    %9 = vector.load %arg6[%c0_9, %c0_10] : memref<1x64xf32, #tpu.memory_space<vmem>>, vector<1x64xf32>
    %10 = vector.broadcast %9 : vector<1x64xf32> to vector<16x64xf32>
    %11 = arith.addf %8, %10 : vector<16x64xf32>
    %c0_11 = arith.constant 0 : index
    %c0_12 = arith.constant 0 : index
    %12 = vector.load %arg7[%c0_11, %c0_12] : memref<64x64xf32, #tpu.memory_space<vmem>>, vector<64x64xf32>
    %cst_13 = arith.constant dense<0.000000e+00> : vector<16x64xf32>
    %13 = tpu.matmul %6, %12, %cst_13 {dimension_numbers = #tpu.dot_dimension_numbers<[1], [0], [0], [1], [0, 0, 1, 1], [], []>} : vector<16x64xf32>, vector<64x64xf32>, vector<16x64xf32> -> vector<16x64xf32>
    %c0_14 = arith.constant 0 : index
    %c0_15 = arith.constant 0 : index
    %14 = vector.load %arg8[%c0_14, %c0_15] : memref<1x64xf32, #tpu.memory_space<vmem>>, vector<1x64xf32>
    %15 = vector.broadcast %14 : vector<1x64xf32> to vector<16x64xf32>
    %16 = arith.addf %13, %15 : vector<16x64xf32>
    %17 = tpu.iota {dimensions = array<i32: 0>} : vector<4x64xi32>
    %18 = tpu.iota {dimensions = array<i32: 1>} : vector<4x64xi32>
    %c16_i32 = arith.constant 16 : i32
    %19 = vector.broadcast %c16_i32 : i32 to vector<4x64xi32>
    %20 = arith.muli %17, %19 : vector<4x64xi32>
    %21 = arith.cmpi sge, %18, %20 : vector<4x64xi32>
    %c16_i32_16 = arith.constant 16 : i32
    %22 = vector.broadcast %c16_i32_16 : i32 to vector<4x64xi32>
    %23 = arith.addi %20, %22 : vector<4x64xi32>
    %24 = arith.cmpi slt, %18, %23 : vector<4x64xi32>
    %25 = arith.andi %21, %24 : vector<4x64xi1>
    %26 = arith.extui %25 : vector<4x64xi1> to vector<4x64xi32>
    %27 = arith.sitofp %26 : vector<4x64xi32> to vector<4x64xf32>
    %28 = tpu.iota {dimensions = array<i32: 1>} : vector<64x4xi32>
    %29 = tpu.iota {dimensions = array<i32: 0>} : vector<64x4xi32>
    %c16_i32_17 = arith.constant 16 : i32
    %30 = vector.broadcast %c16_i32_17 : i32 to vector<64x4xi32>
    %31 = arith.muli %28, %30 : vector<64x4xi32>
    %32 = arith.cmpi sge, %29, %31 : vector<64x4xi32>
    %c16_i32_18 = arith.constant 16 : i32
    %33 = vector.broadcast %c16_i32_18 : i32 to vector<64x4xi32>
    %34 = arith.addi %31, %33 : vector<64x4xi32>
    %35 = arith.cmpi slt, %29, %34 : vector<64x4xi32>
    %36 = arith.andi %32, %35 : vector<64x4xi1>
    %37 = arith.extui %36 : vector<64x4xi1> to vector<64x4xi32>
    %38 = arith.sitofp %37 : vector<64x4xi32> to vector<64x4xf32>
    %39 = arith.mulf %6, %6 : vector<16x64xf32>
    %cst_19 = arith.constant dense<0.000000e+00> : vector<16x4xf32>
    %40 = tpu.matmul %39, %38, %cst_19 {dimension_numbers = #tpu.dot_dimension_numbers<[1], [0], [0], [1], [0, 0, 1, 1], [], []>} : vector<16x64xf32>, vector<64x4xf32>, vector<16x4xf32> -> vector<16x4xf32>
    %cst_20 = arith.constant 1.000000e-16 : f32
    %41 = vector.broadcast %cst_20 : f32 to vector<16x4xf32>
    %42 = arith.maximumf %40, %41 : vector<16x4xf32>
    %43 = math.rsqrt %42 : vector<16x4xf32>
    %cst_21 = arith.constant dense<0.000000e+00> : vector<16x64xf32>
    %44 = tpu.matmul %43, %27, %cst_21 {dimension_numbers = #tpu.dot_dimension_numbers<[1], [0], [0], [1], [0, 0, 1, 1], [], []>} : vector<16x4xf32>, vector<4x64xf32>, vector<16x64xf32> -> vector<16x64xf32>
    %45 = arith.mulf %6, %44 : vector<16x64xf32>
    %46 = vector.shape_cast %45 : vector<16x64xf32> to vector<2x8x64xf32>
    %47 = vector.shape_cast %11 : vector<16x64xf32> to vector<2x8x64xf32>
    %48 = vector.shape_cast %16 : vector<16x64xf32> to vector<2x8x64xf32>
    %49 = vector.shape_cast %46 : vector<2x8x64xf32> to vector<2x1x8x64xf32>
    %50 = vector.shape_cast %27 : vector<4x64xf32> to vector<1x4x1x64xf32>
    %51 = vector.broadcast %49 : vector<2x1x8x64xf32> to vector<2x4x8x64xf32>
    %52 = vector.broadcast %50 : vector<1x4x1x64xf32> to vector<2x4x8x64xf32>
    %53 = arith.mulf %51, %52 : vector<2x4x8x64xf32>
    %54 = vector.shape_cast %53 : vector<2x4x8x64xf32> to vector<2x32x64xf32>
    %55 = vector.shape_cast %47 : vector<2x8x64xf32> to vector<2x1x8x64xf32>
    %56 = vector.shape_cast %27 : vector<4x64xf32> to vector<1x4x1x64xf32>
    %57 = vector.broadcast %55 : vector<2x1x8x64xf32> to vector<2x4x8x64xf32>
    %58 = vector.broadcast %56 : vector<1x4x1x64xf32> to vector<2x4x8x64xf32>
    %59 = arith.mulf %57, %58 : vector<2x4x8x64xf32>
    %60 = vector.shape_cast %59 : vector<2x4x8x64xf32> to vector<2x32x64xf32>
    "tpu.trace_start"() <{level = 10 : i32, message = "bpd,bjd->bpj"}> : () -> ()
    %cst_22 = arith.constant dense<0.000000e+00> : vector<2x32x8xf32>
    %61 = tpu.matmul %54, %46, %cst_22 {dimension_numbers = #tpu.dot_dimension_numbers<[2], [2], [1], [1], [0, 0, 0, 1, 1, 1], [0], [0]>} : vector<2x32x64xf32>, vector<2x8x64xf32>, vector<2x32x8xf32> -> vector<2x32x8xf32>
    %cst_23 = arith.constant dense<0.000000e+00> : vector<2x32x8xf32>
    %62 = tpu.matmul %60, %48, %cst_23 {dimension_numbers = #tpu.dot_dimension_numbers<[2], [2], [1], [1], [0, 0, 0, 1, 1, 1], [0], [0]>} : vector<2x32x64xf32>, vector<2x8x64xf32>, vector<2x32x8xf32> -> vector<2x32x8xf32>
    "tpu.trace_stop"() : () -> ()
    %cst_24 = arith.constant 2.500000e-01 : f32
    %63 = vector.broadcast %cst_24 : f32 to vector<2x32x8xf32>
    %64 = arith.mulf %62, %63 : vector<2x32x8xf32>
    %c0_25 = arith.constant 0 : index
    %c0_26 = arith.constant 0 : index
    %c0_27 = arith.constant 0 : index
    %65 = vector.load %arg2[%c0_25, %c0_26, %c0_27] : memref<2x8x8xi8, #tpu.memory_space<vmem>>, vector<2x8x8xi8>
    %66 = arith.sitofp %65 : vector<2x8x8xi8> to vector<2x8x8xf32>
    %67 = vector.shape_cast %66 : vector<2x8x8xf32> to vector<2x1x8x8xf32>
    %68 = vector.shape_cast %67 : vector<2x1x8x8xf32> to vector<2x1x8x8xf32>
    %69 = vector.broadcast %68 : vector<2x1x8x8xf32> to vector<2x4x8x8xf32>
    %70 = vector.shape_cast %69 : vector<2x4x8x8xf32> to vector<2x32x8xf32>
    %cst_28 = arith.constant 5.000000e-01 : f32
    %71 = vector.broadcast %cst_28 : f32 to vector<2x32x8xf32>
    %72 = arith.cmpf ogt, %70, %71 : vector<2x32x8xf32>
    %cst_29 = arith.constant 0.000000e+00 : f32
    %73 = vector.broadcast %cst_29 : f32 to vector<2x32x8xf32>
    %74 = arith.select %72, %73, %61 : vector<2x32x8xi1>, vector<2x32x8xf32>
    %cst_30 = arith.constant 1.000000e-01 : f32
    %75 = vector.broadcast %cst_30 : f32 to vector<2x32x8xf32>
    %76 = arith.cmpf ogt, %74, %75 : vector<2x32x8xf32>
    %77 = arith.extui %76 : vector<2x32x8xi1> to vector<2x32x8xi32>
    %78 = arith.sitofp %77 : vector<2x32x8xi32> to vector<2x32x8xf32>
    %cst_31 = arith.constant -1.000000e+10 : f32
    %79 = vector.broadcast %cst_31 : f32 to vector<2x32x8xf32>
    %80 = arith.select %72, %79, %64 : vector<2x32x8xi1>, vector<2x32x8xf32>
    %cst_32 = arith.constant dense<0xFF800000> : vector<2x32xf32>
    %81 = vector.multi_reduction <maximumf>, %80, %cst_32 [2] : vector<2x32x8xf32> to vector<2x32xf32>
    %82 = vector.shape_cast %81 : vector<2x32xf32> to vector<2x32x1xf32>
    %83 = vector.broadcast %82 : vector<2x32x1xf32> to vector<2x32x8xf32>
    %84 = arith.subf %80, %83 : vector<2x32x8xf32>
    %85 = math.exp %84 : vector<2x32x8xf32>
    %cst_33 = arith.constant dense<0.000000e+00> : vector<2x32xf32>
    %86 = vector.multi_reduction <add>, %85, %cst_33 [2] : vector<2x32x8xf32> to vector<2x32xf32>
    %87 = vector.shape_cast %86 : vector<2x32xf32> to vector<2x32x1xf32>
    %88 = tpu.reciprocal %87 {approx = true} : vector<2x32x1xf32> -> vector<2x32x1xf32>
    %89 = vector.broadcast %88 : vector<2x32x1xf32> to vector<2x32x8xf32>
    %90 = arith.mulf %85, %89 : vector<2x32x8xf32>
    %91 = vector.extract_strided_slice %70 {offsets = [0, 0, 0], sizes = [2, 32, 1], strides = [1, 1, 1]} : vector<2x32x8xf32> to vector<2x32x1xf32>
    %cst_34 = arith.constant 1.000000e+00 : f32
    %92 = vector.broadcast %cst_34 : f32 to vector<2x32x1xf32>
    %93 = arith.subf %92, %91 : vector<2x32x1xf32>
    %94 = vector.broadcast %93 : vector<2x32x1xf32> to vector<2x32x8xf32>
    %95 = arith.mulf %90, %94 : vector<2x32x8xf32>
    %96 = arith.mulf %78, %95 : vector<2x32x8xf32>
    %c0_35 = arith.constant 0 : index
    %c0_36 = arith.constant 0 : index
    %c0_37 = arith.constant 0 : index
    %97 = vector.load %arg9[%c0_35, %c0_36, %c0_37] : memref<2x32x8xf32, #tpu.memory_space<vmem>>, vector<2x32x8xf32>
    tpu.vector_store %arg9[%c0_35, %c0_36, %c0_37], %96 {strides = array<i32>} : memref<2x32x8xf32, #tpu.memory_space<vmem>>, vector<2x32x8xf32>,
    return
  }
  func.func @transform_0(%arg0: i32) -> (i32, i32, i32) {
    %c0_i32 = arith.constant 0 : i32
    %c0_i32_0 = arith.constant 0 : i32
    %c0_i32_1 = arith.constant 0 : i32
    %c0_i32_2 = arith.constant 0 : i32
    return %c0_i32, %c0_i32_0, %c0_i32_1 : i32, i32, i32
  }
  func.func @transform_1(%arg0: i32) -> (i32, i32, i32) {
    %c0_i32 = arith.constant 0 : i32
    %c0_i32_0 = arith.constant 0 : i32
    %c0_i32_1 = arith.constant 0 : i32
    %c0_i32_2 = arith.constant 0 : i32
    return %c0_i32, %c0_i32_0, %c0_i32_1 : i32, i32, i32
  }
  func.func @transform_2(%arg0: i32) -> (i32, i32) {
    %c0_i32 = arith.constant 0 : i32
    %c0_i32_0 = arith.constant 0 : i32
    %c0_i32_1 = arith.constant 0 : i32
    return %c0_i32, %c0_i32_0 : i32, i32
  }
  func.func @transform_3(%arg0: i32) -> (i32, i32) {
    %c0_i32 = arith.constant 0 : i32
    %c0_i32_0 = arith.constant 0 : i32
    %c0_i32_1 = arith.constant 0 : i32
    return %c0_i32, %c0_i32_0 : i32, i32
  }
  func.func @transform_4(%arg0: i32) -> (i32, i32) {
    %c0_i32 = arith.constant 0 : i32
    %c0_i32_0 = arith.constant 0 : i32
    %c0_i32_1 = arith.constant 0 : i32
    return %c0_i32, %c0_i32_0 : i32, i32
  }
  func.func @transform_5(%arg0: i32) -> (i32, i32) {
    %c0_i32 = arith.constant 0 : i32
    %c0_i32_0 = arith.constant 0 : i32
    %c0_i32_1 = arith.constant 0 : i32
    return %c0_i32, %c0_i32_0 : i32, i32
  }
  func.func @transform_6(%arg0: i32) -> (i32, i32) {
    %c0_i32 = arith.constant 0 : i32
    %c0_i32_0 = arith.constant 0 : i32
    %c0_i32_1 = arith.constant 0 : i32
    return %c0_i32, %c0_i32_0 : i32, i32
  }
  func.func @transform_7(%arg0: i32) -> (i32, i32) {
    %c0_i32 = arith.constant 0 : i32
    %c0_i32_0 = arith.constant 0 : i32
    %c0_i32_1 = arith.constant 0 : i32
    return %c0_i32, %c0_i32_0 : i32, i32
  }
  func.func @transform_8(%arg0: i32) -> (i32, i32, i32) {
    %c0_i32 = arith.constant 0 : i32
    %c0_i32_0 = arith.constant 0 : i32
    %c0_i32_1 = arith.constant 0 : i32
    %c0_i32_2 = arith.constant 0 : i32
    return %c0_i32, %c0_i32_0, %c0_i32_1 : i32, i32, i32
  }
}

</mosaic_0001>

<llo_original>
// kernel: khead_attn_cos_similarity.1
$region0: #{khead_attn_cos_similarity.1}
  #allocation0 [shape = 'u32[]', space=smem, size = 0x4, offset = 0x4, fixed_abs, tag = 'smem constant byte address 0x4 - core index']
  #allocation1 [shape = 'u32[144,128]{1,0:T(1,128)}', space=vmem, size = 0x12000, scoped, tag = 'internal scratch']
  %s0 = inlined_call_operand.vmem [shape: f32[2,8,64], index: 0, kind: input, shape index: {}]
  %s1 = inlined_call_operand.vmem [shape: s8[2,8,8], index: 1, kind: input, shape index: {}]
  %s2 = inlined_call_operand.hbm [shape: f32[64,64], index: 2, kind: input, shape index: {}]
  %s3 = inlined_call_operand.vmem [shape: f32[1,64], index: 3, kind: input, shape index: {}]
  %s4 = inlined_call_operand.hbm [shape: f32[64,64], index: 4, kind: input, shape index: {}]
  %s5 = inlined_call_operand.vmem [shape: f32[1,64], index: 5, kind: input, shape index: {}]
  %s6 = inlined_call_operand.hbm [shape: f32[64,64], index: 6, kind: input, shape index: {}]
  %s7 = inlined_call_operand.vmem [shape: f32[1,64], index: 7, kind: input, shape index: {}]
  %s8 = inlined_call_operand.hbm [shape: f32[2,32,8], index: 8, kind: output, shape index: {}]
  %s9 = sld [smem:[#allocation0]]
  $region54: #{khead_attn_cos_similarity.1} parent=0
    _
  %s11 = ssub.s32 1, %s9
  %s12 = scalar_select 0, %s11, %s9
  $region1: #{khead_attn_cos_similarity.1} parent=0
    #allocation2 [shape = 'u8[32768]{0}', space=vmem, size = 0x8000, scoped, tag = 'input window, operand 2, single buffered']
    #allocation3 [shape = 's32[1]{0}', space=sflag, size = 0x4, scoped, tag = 'scoped memory for khead_attn_cos_similarity.1']
    #allocation4 [shape = 's32[1]{0}', space=sflag, size = 0x4, scoped, tag = 'scoped memory for khead_attn_cos_similarity.1']
    #allocation5 [shape = 'u8[32768]{0}', space=vmem, size = 0x8000, scoped, tag = 'input window, operand 4, single buffered']
    #allocation6 [shape = 's32[1]{0}', space=sflag, size = 0x4, scoped, tag = 'scoped memory for khead_attn_cos_similarity.1']
    #allocation7 [shape = 'u8[32768]{0}', space=vmem, size = 0x8000, scoped, tag = 'input window, operand 6, single buffered']
    #allocation8 [shape = 'u8[32768]{0}', space=vmem, size = 0x8000, scoped, tag = 'output window, operand 0, single buffered']
    %13 = vsyncpa [#allocation3], 0
    %14 = vsyncpa [#allocation6], 0
    %15 = vsyncpa [#allocation4], 0
    // Predicated region
    $region2: #{khead_attn_cos_similarity.1} parent=1 // pred_check
      _
    $region3: #{khead_attn_cos_similarity.1} parent=1 // pred_check_branch
      %17 = sbr.rel (0) target = $region5
    $region4: #{khead_attn_cos_similarity.1} parent=1 // pred_region
      _
    $region5: #{khead_attn_cos_similarity.1} parent=1 // pred_fallthru
      _
    // Predicated region
    $region6: #{khead_attn_cos_similarity.1} parent=1 // pred_check
      _
    $region7: #{khead_attn_cos_similarity.1} parent=1 // pred_check_branch
      %19 = sbr.rel (0) target = $region9
    $region8: #{khead_attn_cos_similarity.1} parent=1 // pred_region
      _
    $region9: #{khead_attn_cos_similarity.1} parent=1 // pred_fallthru
      _
    // Predicated region
    $region10: #{khead_attn_cos_similarity.1} parent=1 // pred_check
      _
    $region11: #{khead_attn_cos_similarity.1} parent=1 // pred_check_branch
      %21 = sbr.rel (0) target = $region13
    $region12: #{khead_attn_cos_similarity.1} parent=1 // pred_region
      %s23 = ssub.s32 1024, 1024
      %24 = vsyncadd [#allocation3], %s23
      %s25 = sshll.u32 [#allocation2], 4
      %s26 = int_to_ptr.vmem [resolvable:$true] %s25
      %31 = dma.hbm_to_vmem [thread:$0]  %s2, 1024, %s26, [#allocation3], 128, 128, 8
    $region13: #{khead_attn_cos_similarity.1} parent=1 // pred_fallthru
      _
    // Predicated region
    $region14: #{khead_attn_cos_similarity.1} parent=1 // pred_check
      _
    $region15: #{khead_attn_cos_similarity.1} parent=1 // pred_check_branch
      %33 = sbr.rel (0) target = $region17
    $region16: #{khead_attn_cos_similarity.1} parent=1 // pred_region
      _
    $region17: #{khead_attn_cos_similarity.1} parent=1 // pred_fallthru
      _
    // Predicated region
    $region18: #{khead_attn_cos_similarity.1} parent=1 // pred_check
      _
    $region19: #{khead_attn_cos_similarity.1} parent=1 // pred_check_branch
      %35 = sbr.rel (0) target = $region21
    $region20: #{khead_attn_cos_similarity.1} parent=1 // pred_region
      %s37 = ssub.s32 1024, 1024
      %38 = vsyncadd [#allocation6], %s37
      %s39 = sshll.u32 [#allocation5], 4
      %s40 = int_to_ptr.vmem [resolvable:$true] %s39
      %45 = dma.hbm_to_vmem [thread:$0]  %s4, 1024, %s40, [#allocation6], 128, 128, 8
    $region21: #{khead_attn_cos_similarity.1} parent=1 // pred_fallthru
      _
    // Predicated region
    $region22: #{khead_attn_cos_similarity.1} parent=1 // pred_check
      _
    $region23: #{khead_attn_cos_similarity.1} parent=1 // pred_check_branch
      %47 = sbr.rel (0) target = $region25
    $region24: #{khead_attn_cos_similarity.1} parent=1 // pred_region
      _
    $region25: #{khead_attn_cos_similarity.1} parent=1 // pred_fallthru
      _
    // Predicated region
    $region26: #{khead_attn_cos_similarity.1} parent=1 // pred_check
      _
    $region27: #{khead_attn_cos_similarity.1} parent=1 // pred_check_branch
      %49 = sbr.rel (0) target = $region29
    $region28: #{khead_attn_cos_similarity.1} parent=1 // pred_region
      %s51 = ssub.s32 1024, 1024
      %52 = vsyncadd [#allocation6], %s51
      %s53 = sshll.u32 [#allocation7], 4
      %s54 = int_to_ptr.vmem [resolvable:$true] %s53
      %59 = dma.hbm_to_vmem [thread:$0]  %s6, 1024, %s54, [#allocation6], 128, 128, 8
    $region29: #{khead_attn_cos_similarity.1} parent=1 // pred_fallthru
      _
    // Predicated region
    $region30: #{khead_attn_cos_similarity.1} parent=1 // pred_check
      _
    $region31: #{khead_attn_cos_similarity.1} parent=1 // pred_check_branch
      %61 = sbr.rel (0) target = $region33
    $region32: #{khead_attn_cos_similarity.1} parent=1 // pred_region
      _
    $region33: #{khead_attn_cos_similarity.1} parent=1 // pred_fallthru
      _
    // Predicated region
    $region34: #{khead_attn_cos_similarity.1} parent=1 // pred_check
      _
    $region35: #{khead_attn_cos_similarity.1} parent=1 // pred_check_branch
      %63 = sbr.rel (0) target = $region37
    $region36: #{khead_attn_cos_similarity.1} parent=1 // pred_region
      %64 = dma.done [#allocation3], 1024
    $region37: #{khead_attn_cos_similarity.1} parent=1 // pred_fallthru
      _
    // Predicated region
    $region38: #{khead_attn_cos_similarity.1} parent=1 // pred_check
      _
    $region39: #{khead_attn_cos_similarity.1} parent=1 // pred_check_branch
      %66 = sbr.rel (0) target = $region41
    $region40: #{khead_attn_cos_similarity.1} parent=1 // pred_region
      %67 = dma.done [#allocation6], 1024
    $region41: #{khead_attn_cos_similarity.1} parent=1 // pred_fallthru
      _
    // Predicated region
    $region42: #{khead_attn_cos_similarity.1} parent=1 // pred_check
      _
    $region43: #{khead_attn_cos_similarity.1} parent=1 // pred_check_branch
      %69 = sbr.rel (0) target = $region45
    $region44: #{khead_attn_cos_similarity.1} parent=1 // pred_region
      %70 = dma.done [#allocation6], 1024
    $region45: #{khead_attn_cos_similarity.1} parent=1 // pred_fallthru
      _
    %v71 = vld [vmem:[%s0] sm:$0xff]
    %v72 = vld [vmem:[%s0 + $0x8] sm:$0xff]
    %v73 = vld [vmem:[#allocation2] sm:$0xff]
    %v74 = vld [vmem:[#allocation2 + $0x8] sm:$0xff]
    %v75 = vld [vmem:[#allocation2 + $0x10] sm:$0xff]
    %v76 = vld [vmem:[#allocation2 + $0x18] sm:$0xff]
    %v77 = vld [vmem:[#allocation2 + $0x20] sm:$0xff]
    %v78 = vld [vmem:[#allocation2 + $0x28] sm:$0xff]
    %v79 = vld [vmem:[#allocation2 + $0x30] sm:$0xff]
    %v80 = vld [vmem:[#allocation2 + $0x38] sm:$0xff]
    %v81 = vld [vmem:[%s3] sm:$0x1]
    %v83 = vlaneseq
    %v84 = vshrl.u32 %v83, 7
    %v85 = vsub.s32 0, %v84
    %v86 = vrot.slane %v81, %v85
    %vm88 = vcmask 523264
    %v90 = vsel %vm88, %v71, 0
    %v93 = vsel %vm88, %v72, 0
    %95 = vmatprep.subr.mxu0 0.0
    %96 = vmatpush1.msra.mxu0 %v73
    %97 = vmatprep.subr.mxu0 0.0
    %98 = vmatpush1.msra.mxu0 %v74
    %99 = vmatprep.subr.mxu0 0.0
    %100 = vmatpush1.msra.mxu0 %v75
    %101 = vmatprep.subr.mxu0 0.0
    %102 = vmatpush1.msra.mxu0 %v76
    %103 = vmatprep.subr.mxu0 0.0
    %104 = vmatpush1.msra.mxu0 %v77
    %105 = vmatprep.subr.mxu0 0.0
    %106 = vmatpush1.msra.mxu0 %v78
    %107 = vmatprep.subr.mxu0 0.0
    %108 = vmatpush1.msra.mxu0 %v79
    %109 = vmatprep.subr.mxu0 0.0
    %110 = vmatpush1.msra.mxu0 %v80
    %111 = vmatprep.subr.mxu0 0.0
    %112 = vmatpush1.msra.mxu0 0.0
    %113 = vmatprep.subr.mxu0 0.0
    %114 = vmatpush1.msra.mxu0 0.0
    %115 = vmatprep.subr.mxu0 0.0
    %116 = vmatpush1.msra.mxu0 0.0
    %117 = vmatprep.subr.mxu0 0.0
    %118 = vmatpush1.msra.mxu0 0.0
    %119 = vmatprep.subr.mxu0 0.0
    %120 = vmatpush1.msra.mxu0 0.0
    %121 = vmatprep.subr.mxu0 0.0
    %122 = vmatpush1.msra.mxu0 0.0
    %123 = vmatprep.subr.mxu0 0.0
    %124 = vmatpush1.msra.mxu0 0.0
    %125 = vmatprep.subr.mxu0 0.0
    %126 = vmatpush1.msra.mxu0 0.0
    %127 = vmatprep.subr.mxu0 0.0
    %128 = vmatpush1.msra.mxu0 0.0
    %129 = vmatprep.subr.mxu0 0.0
    %130 = vmatpush1.msra.mxu0 0.0
    %131 = vmatprep.subr.mxu0 0.0
    %132 = vmatpush1.msra.mxu0 0.0
    %133 = vmatprep.subr.mxu0 0.0
    %134 = vmatpush1.msra.mxu0 0.0
    %135 = vmatprep.subr.mxu0 0.0
    %136 = vmatpush1.msra.mxu0 0.0
    %137 = vmatprep.subr.mxu0 0.0
    %138 = vmatpush1.msra.mxu0 0.0
    %139 = vmatprep.subr.mxu0 0.0
    %140 = vmatpush1.msra.mxu0 0.0
    %141 = vmatprep.subr.mxu0 0.0
    %142 = vmatpush1.msra.mxu0 0.0
    %143 = vmatprep.subr.mxu0 0.0
    %144 = vmatpush1.msra.mxu0 0.0
    %145 = vmatprep.subr.mxu0 0.0
    %146 = vmatpush1.msra.mxu0 0.0
    %147 = vmatprep.subr.mxu0 0.0
    %148 = vmatpush1.msra.mxu0 0.0
    %149 = vmatprep.subr.mxu0 0.0
    %150 = vmatpush1.msra.mxu0 0.0
    %151 = vmatprep.subr.mxu0 0.0
    %152 = vmatpush1.msra.mxu0 0.0
    %153 = vmatprep.subr.mxu0 0.0
    %154 = vmatpush1.msra.mxu0 0.0
    %155 = vmatprep.subr.mxu0 0.0
    %156 = vmatpush1.msra.mxu0 0.0
    %157 = vmatprep.subr.mxu0 0.0
    %158 = vmatpush1.msra.mxu0 0.0
    %159 = vmatprep.mubr.f32.mxu0 0.0
    %160 = vmatmul.mubr.f32.gmra.mrb[0].mxu0 %v90
    %v161 = vpop.f32.mrb[0].mxu0
    %v162 = vadd.f32 %v86, %v161
    %v163 = vpop.f32.mrb[0].mxu0
    %164 = vmatprep.mubr.f32.mxu0 0.0
    %165 = vmatmul.mubr.f32.gmra.mrb[0].mxu0 %v93
    %v166 = vpop.f32.mrb[0].mxu0
    %v167 = vadd.f32 %v86, %v166
    %v168 = vpop.f32.mrb[0].mxu0
    %169 = vdwg.mxu0
    %v170 = vld [vmem:[#allocation5] sm:$0xff]
    %v171 = vld [vmem:[#allocation5 + $0x8] sm:$0xff]
    %v172 = vld [vmem:[#allocation5 + $0x10] sm:$0xff]
    %v173 = vld [vmem:[#allocation5 + $0x18] sm:$0xff]
    %v174 = vld [vmem:[#allocation5 + $0x20] sm:$0xff]
    %v175 = vld [vmem:[#allocation5 + $0x28] sm:$0xff]
    %v176 = vld [vmem:[#allocation5 + $0x30] sm:$0xff]
    %v177 = vld [vmem:[#allocation5 + $0x38] sm:$0xff]
    %v178 = vld [vmem:[%s5] sm:$0x1]
    %v180 = vlaneseq
    %v181 = vshrl.u32 %v180, 7
    %v182 = vsub.s32 0, %v181
    %v183 = vrot.slane %v178, %v182
    %v186 = vsel %vm88, %v162, 0
    %v189 = vsel %vm88, %v167, 0
    %191 = vmatprep.subr.mxu0 0.0
    %192 = vmatpush1.msra.mxu0 %v170
    %193 = vmatprep.subr.mxu0 0.0
    %194 = vmatpush1.msra.mxu0 %v171
    %195 = vmatprep.subr.mxu0 0.0
    %196 = vmatpush1.msra.mxu0 %v172
    %197 = vmatprep.subr.mxu0 0.0
    %198 = vmatpush1.msra.mxu0 %v173
    %199 = vmatprep.subr.mxu0 0.0
    %200 = vmatpush1.msra.mxu0 %v174
    %201 = vmatprep.subr.mxu0 0.0
    %202 = vmatpush1.msra.mxu0 %v175
    %203 = vmatprep.subr.mxu0 0.0
    %204 = vmatpush1.msra.mxu0 %v176
    %205 = vmatprep.subr.mxu0 0.0
    %206 = vmatpush1.msra.mxu0 %v177
    %207 = vmatprep.subr.mxu0 0.0
    %208 = vmatpush1.msra.mxu0 0.0
    %209 = vmatprep.subr.mxu0 0.0
    %210 = vmatpush1.msra.mxu0 0.0
    %211 = vmatprep.subr.mxu0 0.0
    %212 = vmatpush1.msra.mxu0 0.0
    %213 = vmatprep.subr.mxu0 0.0
    %214 = vmatpush1.msra.mxu0 0.0
    %215 = vmatprep.subr.mxu0 0.0
    %216 = vmatpush1.msra.mxu0 0.0
    %217 = vmatprep.subr.mxu0 0.0
    %218 = vmatpush1.msra.mxu0 0.0
    %219 = vmatprep.subr.mxu0 0.0
    %220 = vmatpush1.msra.mxu0 0.0
    %221 = vmatprep.subr.mxu0 0.0
    %222 = vmatpush1.msra.mxu0 0.0
    %223 = vmatprep.subr.mxu0 0.0
    %224 = vmatpush1.msra.mxu0 0.0
    %225 = vmatprep.subr.mxu0 0.0
    %226 = vmatpush1.msra.mxu0 0.0
    %227 = vmatprep.subr.mxu0 0.0
    %228 = vmatpush1.msra.mxu0 0.0
    %229 = vmatprep.subr.mxu0 0.0
    %230 = vmatpush1.msra.mxu0 0.0
    %231 = vmatprep.subr.mxu0 0.0
    %232 = vmatpush1.msra.mxu0 0.0
    %233 = vmatprep.subr.mxu0 0.0
    %234 = vmatpush1.msra.mxu0 0.0
    %235 = vmatprep.subr.mxu0 0.0
    %236 = vmatpush1.msra.mxu0 0.0
    %237 = vmatprep.subr.mxu0 0.0
    %238 = vmatpush1.msra.mxu0 0.0
    %239 = vmatprep.subr.mxu0 0.0
    %240 = vmatpush1.msra.mxu0 0.0
    %241 = vmatprep.subr.mxu0 0.0
    %242 = vmatpush1.msra.mxu0 0.0
    %243 = vmatprep.subr.mxu0 0.0
    %244 = vmatpush1.msra.mxu0 0.0
    %245 = vmatprep.subr.mxu0 0.0
    %246 = vmatpush1.msra.mxu0 0.0
    %247 = vmatprep.subr.mxu0 0.0
    %248 = vmatpush1.msra.mxu0 0.0
    %249 = vmatprep.subr.mxu0 0.0
    %250 = vmatpush1.msra.mxu0 0.0
    %251 = vmatprep.subr.mxu0 0.0
    %252 = vmatpush1.msra.mxu0 0.0
    %253 = vmatprep.subr.mxu0 0.0
    %254 = vmatpush1.msra.mxu0 0.0
    %255 = vmatprep.mubr.f32.mxu0 0.0
    %256 = vmatmul.mubr.f32.gmra.mrb[0].mxu0 %v186
    %v257 = vpop.f32.mrb[0].mxu0
    %v258 = vadd.f32 %v183, %v257
    %v259 = vpop.f32.mrb[0].mxu0
    %260 = vmatprep.mubr.f32.mxu0 0.0
    %261 = vmatmul.mubr.f32.gmra.mrb[0].mxu0 %v189
    %v262 = vpop.f32.mrb[0].mxu0
    %v263 = vadd.f32 %v183, %v262
    %v264 = vpop.f32.mrb[0].mxu0
    %265 = vdwg.mxu0
    %v266 = vld [vmem:[#allocation7] sm:$0xff]
    %v267 = vld [vmem:[#allocation7 + $0x8] sm:$0xff]
    %v268 = vld [vmem:[#allocation7 + $0x10] sm:$0xff]
    %v269 = vld [vmem:[#allocation7 + $0x18] sm:$0xff]
    %v270 = vld [vmem:[#allocation7 + $0x20] sm:$0xff]
    %v271 = vld [vmem:[#allocation7 + $0x28] sm:$0xff]
    %v272 = vld [vmem:[#allocation7 + $0x30] sm:$0xff]
    %v273 = vld [vmem:[#allocation7 + $0x38] sm:$0xff]
    %v274 = vld [vmem:[%s7] sm:$0x1]
    %v276 = vlaneseq
    %v277 = vshrl.u32 %v276, 7
    %v278 = vsub.s32 0, %v277
    %v279 = vrot.slane %v274, %v278
    %281 = vmatprep.subr.mxu0 0.0
    %282 = vmatpush1.msra.mxu0 %v266
    %283 = vmatprep.subr.mxu0 0.0
    %284 = vmatpush1.msra.mxu0 %v267
    %285 = vmatprep.subr.mxu0 0.0
    %286 = vmatpush1.msra.mxu0 %v268
    %287 = vmatprep.subr.mxu0 0.0
    %288 = vmatpush1.msra.mxu0 %v269
    %289 = vmatprep.subr.mxu0 0.0
    %290 = vmatpush1.msra.mxu0 %v270
    %291 = vmatprep.subr.mxu0 0.0
    %292 = vmatpush1.msra.mxu0 %v271
    %293 = vmatprep.subr.mxu0 0.0
    %294 = vmatpush1.msra.mxu0 %v272
    %295 = vmatprep.subr.mxu0 0.0
    %296 = vmatpush1.msra.mxu0 %v273
    %297 = vmatprep.subr.mxu0 0.0
    %298 = vmatpush1.msra.mxu0 0.0
    %299 = vmatprep.subr.mxu0 0.0
    %300 = vmatpush1.msra.mxu0 0.0
    %301 = vmatprep.subr.mxu0 0.0
    %302 = vmatpush1.msra.mxu0 0.0
    %303 = vmatprep.subr.mxu0 0.0
    %304 = vmatpush1.msra.mxu0 0.0
    %305 = vmatprep.subr.mxu0 0.0
    %306 = vmatpush1.msra.mxu0 0.0
    %307 = vmatprep.subr.mxu0 0.0
    %308 = vmatpush1.msra.mxu0 0.0
    %309 = vmatprep.subr.mxu0 0.0
    %310 = vmatpush1.msra.mxu0 0.0
    %311 = vmatprep.subr.mxu0 0.0
    %312 = vmatpush1.msra.mxu0 0.0
    %313 = vmatprep.subr.mxu0 0.0
    %314 = vmatpush1.msra.mxu0 0.0
    %315 = vmatprep.subr.mxu0 0.0
    %316 = vmatpush1.msra.mxu0 0.0
    %317 = vmatprep.subr.mxu0 0.0
    %318 = vmatpush1.msra.mxu0 0.0
    %319 = vmatprep.subr.mxu0 0.0
    %320 = vmatpush1.msra.mxu0 0.0
    %321 = vmatprep.subr.mxu0 0.0
    %322 = vmatpush1.msra.mxu0 0.0
    %323 = vmatprep.subr.mxu0 0.0
    %324 = vmatpush1.msra.mxu0 0.0
    %325 = vmatprep.subr.mxu0 0.0
    %326 = vmatpush1.msra.mxu0 0.0
    %327 = vmatprep.subr.mxu0 0.0
    %328 = vmatpush1.msra.mxu0 0.0
    %329 = vmatprep.subr.mxu0 0.0
    %330 = vmatpush1.msra.mxu0 0.0
    %331 = vmatprep.subr.mxu0 0.0
    %332 = vmatpush1.msra.mxu0 0.0
    %333 = vmatprep.subr.mxu0 0.0
    %334 = vmatpush1.msra.mxu0 0.0
    %335 = vmatprep.subr.mxu0 0.0
    %336 = vmatpush1.msra.mxu0 0.0
    %337 = vmatprep.subr.mxu0 0.0
    %338 = vmatpush1.msra.mxu0 0.0
    %339 = vmatprep.subr.mxu0 0.0
    %340 = vmatpush1.msra.mxu0 0.0
    %341 = vmatprep.subr.mxu0 0.0
    %342 = vmatpush1.msra.mxu0 0.0
    %343 = vmatprep.subr.mxu0 0.0
    %344 = vmatpush1.msra.mxu0 0.0
    %345 = vmatprep.mubr.f32.mxu0 0.0
    %346 = vmatmul.mubr.f32.gmra.mrb[0].mxu0 %v186
    %v347 = vpop.f32.mrb[0].mxu0
    %v348 = vadd.f32 %v279, %v347
    %v349 = vpop.f32.mrb[0].mxu0
    %350 = vmatprep.mubr.f32.mxu0 0.0
    %351 = vmatmul.mubr.f32.gmra.mrb[0].mxu0 %v189
    %v352 = vpop.f32.mrb[0].mxu0
    %v353 = vadd.f32 %v279, %v352
    %v354 = vpop.f32.mrb[0].mxu0
    %355 = vdwg.mxu0
    %v356 = vlaneseq
    %v357 = vshrl.u32 %v356, 7
    %v358 = vlaneseq
    %v359 = vand.u32 %v358, 127
    %v360 = vmul.u32 %v357, 16
    %vm361 = vcmp.ge.s32.totalorder %v359, %v360
    %v362 = vadd.s32 %v360, 16
    %vm363 = vcmp.lt.s32.totalorder %v359, %v362
    %vm364 = vmand %vm361, %vm363
    %v365 = vsel %vm364, 1, 0
    %v366 = vcvt.s32.f32 %v365
    %v367 = vadd.s32 %v357, 8
    %v368 = vadd.s32 %v357, 16
    %v369 = vadd.s32 %v357, 24
    %v370 = vadd.s32 %v357, 32
    %v371 = vadd.s32 %v357, 40
    %v372 = vadd.s32 %v357, 48
    %v373 = vadd.s32 %v357, 56
    %v374 = vmul.u32 %v359, 16
    %vm375 = vcmp.ge.s32.totalorder %v357, %v374
    %vm376 = vcmp.ge.s32.totalorder %v367, %v374
    %vm377 = vcmp.ge.s32.totalorder %v368, %v374
    %vm378 = vcmp.ge.s32.totalorder %v369, %v374
    %vm379 = vcmp.ge.s32.totalorder %v370, %v374
    %vm380 = vcmp.ge.s32.totalorder %v371, %v374
    %vm381 = vcmp.ge.s32.totalorder %v372, %v374
    %vm382 = vcmp.ge.s32.totalorder %v373, %v374
    %v383 = vadd.s32 %v374, 16
    %vm384 = vcmp.lt.s32.totalorder %v357, %v383
    %vm385 = vcmp.lt.s32.totalorder %v367, %v383
    %vm386 = vcmp.lt.s32.totalorder %v368, %v383
    %vm387 = vcmp.lt.s32.totalorder %v369, %v383
    %vm388 = vcmp.lt.s32.totalorder %v370, %v383
    %vm389 = vcmp.lt.s32.totalorder %v371, %v383
    %vm390 = vcmp.lt.s32.totalorder %v372, %v383
    %vm391 = vcmp.lt.s32.totalorder %v373, %v383
    %vm392 = vmand %vm375, %vm384
    %vm393 = vmand %vm376, %vm385
    %vm394 = vmand %vm377, %vm386
    %vm395 = vmand %vm378, %vm387
    %vm396 = vmand %vm379, %vm388
    %vm397 = vmand %vm380, %vm389
    %vm398 = vmand %vm381, %vm390
    %vm399 = vmand %vm382, %vm391
    %v400 = vsel %vm392, 1, 0
    %v401 = vsel %vm393, 1, 0
    %v402 = vsel %vm394, 1, 0
    %v403 = vsel %vm395, 1, 0
    %v404 = vsel %vm396, 1, 0
    %v405 = vsel %vm397, 1, 0
    %v406 = vsel %vm398, 1, 0
    %v407 = vsel %vm399, 1, 0
    %v408 = vcvt.s32.f32 %v400
    %v409 = vcvt.s32.f32 %v401
    %v410 = vcvt.s32.f32 %v402
    %v411 = vcvt.s32.f32 %v403
    %v412 = vcvt.s32.f32 %v404
    %v413 = vcvt.s32.f32 %v405
    %v414 = vcvt.s32.f32 %v406
    %v415 = vcvt.s32.f32 %v407
    %v416 = vmul.f32 %v162, %v162
    %v417 = vmul.f32 %v167, %v167
    %v419 = vsel %vm88, %v416, 0
    %v422 = vsel %vm88, %v417, 0
    %424 = vmatprep.subr.mxu0 0.0
    %425 = vmatpush1.msra.mxu0 %v408
    %426 = vmatprep.subr.mxu0 0.0
    %427 = vmatpush1.msra.mxu0 %v409
    %428 = vmatprep.subr.mxu0 0.0
    %429 = vmatpush1.msra.mxu0 %v410
    %430 = vmatprep.subr.mxu0 0.0
    %431 = vmatpush1.msra.mxu0 %v411
    %432 = vmatprep.subr.mxu0 0.0
    %433 = vmatpush1.msra.mxu0 %v412
    %434 = vmatprep.subr.mxu0 0.0
    %435 = vmatpush1.msra.mxu0 %v413
    %436 = vmatprep.subr.mxu0 0.0
    %437 = vmatpush1.msra.mxu0 %v414
    %438 = vmatprep.subr.mxu0 0.0
    %439 = vmatpush1.msra.mxu0 %v415
    %440 = vmatprep.subr.mxu0 0.0
    %441 = vmatpush1.msra.mxu0 0.0
    %442 = vmatprep.subr.mxu0 0.0
    %443 = vmatpush1.msra.mxu0 0.0
    %444 = vmatprep.subr.mxu0 0.0
    %445 = vmatpush1.msra.mxu0 0.0
    %446 = vmatprep.subr.mxu0 0.0
    %447 = vmatpush1.msra.mxu0 0.0
    %448 = vmatprep.subr.mxu0 0.0
    %449 = vmatpush1.msra.mxu0 0.0
    %450 = vmatprep.subr.mxu0 0.0
    %451 = vmatpush1.msra.mxu0 0.0
    %452 = vmatprep.subr.mxu0 0.0
    %453 = vmatpush1.msra.mxu0 0.0
    %454 = vmatprep.subr.mxu0 0.0
    %455 = vmatpush1.msra.mxu0 0.0
    %456 = vmatprep.subr.mxu0 0.0
    %457 = vmatpush1.msra.mxu0 0.0
    %458 = vmatprep.subr.mxu0 0.0
    %459 = vmatpush1.msra.mxu0 0.0
    %460 = vmatprep.subr.mxu0 0.0
    %461 = vmatpush1.msra.mxu0 0.0
    %462 = vmatprep.subr.mxu0 0.0
    %463 = vmatpush1.msra.mxu0 0.0
    %464 = vmatprep.subr.mxu0 0.0
    %465 = vmatpush1.msra.mxu0 0.0
    %466 = vmatprep.subr.mxu0 0.0
    %467 = vmatpush1.msra.mxu0 0.0
    %468 = vmatprep.subr.mxu0 0.0
    %469 = vmatpush1.msra.mxu0 0.0
    %470 = vmatprep.subr.mxu0 0.0
    %471 = vmatpush1.msra.mxu0 0.0
    %472 = vmatprep.subr.mxu0 0.0
    %473 = vmatpush1.msra.mxu0 0.0
    %474 = vmatprep.subr.mxu0 0.0
    %475 = vmatpush1.msra.mxu0 0.0
    %476 = vmatprep.subr.mxu0 0.0
    %477 = vmatpush1.msra.mxu0 0.0
    %478 = vmatprep.subr.mxu0 0.0
    %479 = vmatpush1.msra.mxu0 0.0
    %480 = vmatprep.subr.mxu0 0.0
    %481 = vmatpush1.msra.mxu0 0.0
    %482 = vmatprep.subr.mxu0 0.0
    %483 = vmatpush1.msra.mxu0 0.0
    %484 = vmatprep.subr.mxu0 0.0
    %485 = vmatpush1.msra.mxu0 0.0
    %486 = vmatprep.subr.mxu0 0.0
    %487 = vmatpush1.msra.mxu0 0.0
    %488 = vmatprep.mubr.f32.mxu0 0.0
    %489 = vmatmul.mubr.f32.gmra.mrb[0].mxu0 %v419
    %v490 = vpop.f32.mrb[0].mxu0
    %v491 = vadd.f32 0.0, %v490
    %v492 = vpop.f32.mrb[0].mxu0
    %493 = vmatprep.mubr.f32.mxu0 0.0
    %494 = vmatmul.mubr.f32.gmra.mrb[0].mxu0 %v422
    %v495 = vpop.f32.mrb[0].mxu0
    %v496 = vadd.f32 0.0, %v495
    %v497 = vpop.f32.mrb[0].mxu0
    %498 = vdwg.mxu0
    %v499 = vmax.f32 %v491, 1e-16
    %v500 = vmax.f32 %v496, 1e-16
    %v501 = vrsqrt.pop %v499
    %v502 = vrsqrt.pop %v500
    %vm503 = vcmask 31744
    %v505 = vsel %vm503, %v501, 0
    %v508 = vsel %vm503, %v502, 0
    %vm510 = vcmask 1043456
    %v512 = vsel %vm510, %v366, 0
    %514 = vmatprep.subr.mxu0 0.0
    %515 = vmatpush1.msra.mxu0 %v512
    %516 = vmatprep.subr.mxu0 0.0
    %517 = vmatpush1.msra.mxu0 0.0
    %518 = vmatprep.subr.mxu0 0.0
    %519 = vmatpush1.msra.mxu0 0.0
    %520 = vmatprep.subr.mxu0 0.0
    %521 = vmatpush1.msra.mxu0 0.0
    %522 = vmatprep.subr.mxu0 0.0
    %523 = vmatpush1.msra.mxu0 0.0
    %524 = vmatprep.subr.mxu0 0.0
    %525 = vmatpush1.msra.mxu0 0.0
    %526 = vmatprep.subr.mxu0 0.0
    %527 = vmatpush1.msra.mxu0 0.0
    %528 = vmatprep.subr.mxu0 0.0
    %529 = vmatpush1.msra.mxu0 0.0
    %530 = vmatprep.subr.mxu0 0.0
    %531 = vmatpush1.msra.mxu0 0.0
    %532 = vmatprep.subr.mxu0 0.0
    %533 = vmatpush1.msra.mxu0 0.0
    %534 = vmatprep.subr.mxu0 0.0
    %535 = vmatpush1.msra.mxu0 0.0
    %536 = vmatprep.subr.mxu0 0.0
    %537 = vmatpush1.msra.mxu0 0.0
    %538 = vmatprep.subr.mxu0 0.0
    %539 = vmatpush1.msra.mxu0 0.0
    %540 = vmatprep.subr.mxu0 0.0
    %541 = vmatpush1.msra.mxu0 0.0
    %542 = vmatprep.subr.mxu0 0.0
    %543 = vmatpush1.msra.mxu0 0.0
    %544 = vmatprep.subr.mxu0 0.0
    %545 = vmatpush1.msra.mxu0 0.0
    %546 = vmatprep.subr.mxu0 0.0
    %547 = vmatpush1.msra.mxu0 0.0
    %548 = vmatprep.subr.mxu0 0.0
    %549 = vmatpush1.msra.mxu0 0.0
    %550 = vmatprep.subr.mxu0 0.0
    %551 = vmatpush1.msra.mxu0 0.0
    %552 = vmatprep.subr.mxu0 0.0
    %553 = vmatpush1.msra.mxu0 0.0
    %554 = vmatprep.subr.mxu0 0.0
    %555 = vmatpush1.msra.mxu0 0.0
    %556 = vmatprep.subr.mxu0 0.0
    %557 = vmatpush1.msra.mxu0 0.0
    %558 = vmatprep.subr.mxu0 0.0
    %559 = vmatpush1.msra.mxu0 0.0
    %560 = vmatprep.subr.mxu0 0.0
    %561 = vmatpush1.msra.mxu0 0.0
    %562 = vmatprep.subr.mxu0 0.0
    %563 = vmatpush1.msra.mxu0 0.0
    %564 = vmatprep.subr.mxu0 0.0
    %565 = vmatpush1.msra.mxu0 0.0
    %566 = vmatprep.subr.mxu0 0.0
    %567 = vmatpush1.msra.mxu0 0.0
    %568 = vmatprep.subr.mxu0 0.0
    %569 = vmatpush1.msra.mxu0 0.0
    %570 = vmatprep.subr.mxu0 0.0
    %571 = vmatpush1.msra.mxu0 0.0
    %572 = vmatprep.subr.mxu0 0.0
    %573 = vmatpush1.msra.mxu0 0.0
    %574 = vmatprep.subr.mxu0 0.0
    %575 = vmatpush1.msra.mxu0 0.0
    %576 = vmatprep.subr.mxu0 0.0
    %577 = vmatpush1.msra.mxu0 0.0
    %578 = vmatprep.mubr.f32.mxu0 0.0
    %579 = vmatmul.mubr.f32.gmra.mrb[0].mxu0 %v505
    %v580 = vpop.f32.mrb[0].mxu0
    %v581 = vadd.f32 0.0, %v580
    %v582 = vpop.f32.mrb[0].mxu0
    %583 = vmatprep.mubr.f32.mxu0 0.0
    %584 = vmatmul.mubr.f32.gmra.mrb[0].mxu0 %v508
    %v585 = vpop.f32.mrb[0].mxu0
    %v586 = vadd.f32 0.0, %v585
    %v587 = vpop.f32.mrb[0].mxu0
    %588 = vdwg.mxu0
    %v589 = vmul.f32 %v162, %v581
    %v590 = vmul.f32 %v167, %v586
    %v592 = vunpack.c.l.s4 1966171168
    %v593 = vunpack.c.0.s8 %v592
    %v594 = vlaneseq
    %v595 = vshrl.u32 %v594, 7
    %v596 = vsub.s32 %v593, %v595
    %v597 = vrot.slane %v366, %v596
    %v598 = vcombine.high %v597, %v597
    %v600 = vunpack.c.l.s4 1966171168
    %v601 = vunpack.c.0.s8 %v600
    %v602 = vlaneseq
    %v603 = vshrl.u32 %v602, 7
    %v604 = vsub.s32 %v601, %v603
    %v605 = vrot.slane %v597, %v604
    %v607 = vunpack.c.l.s4 1966171168
    %v608 = vunpack.c.0.s8 %v607
    %v609 = vlaneseq
    %v610 = vshrl.u32 %v609, 7
    %v611 = vsub.s32 %v608, %v610
    %v612 = vrot.slane %v598, %v611
    %v613 = vcombine.high %v605, %v605
    %v614 = vcombine.high %v612, %v612
    %v615 = vlaneseq
    %v616 = vshrl.u32 %v615, 7
    %v617 = vsub.s32 0, %v616
    %v618 = vrot.slane %v605, %v617
    %v619 = vlaneseq
    %v620 = vshrl.u32 %v619, 7
    %v621 = vsub.s32 0, %v620
    %v622 = vrot.slane %v612, %v621
    %v623 = vlaneseq
    %v624 = vshrl.u32 %v623, 7
    %v625 = vsub.s32 0, %v624
    %v626 = vrot.slane %v613, %v625
    %v627 = vlaneseq
    %v628 = vshrl.u32 %v627, 7
    %v629 = vsub.s32 0, %v628
    %v630 = vrot.slane %v614, %v629
    %v635 = vmul.f32 %v589, %v618
    %v636 = vmul.f32 %v589, %v622
    %v637 = vmul.f32 %v589, %v626
    %v638 = vmul.f32 %v589, %v630
    %v639 = vmul.f32 %v590, %v618
    %v640 = vmul.f32 %v590, %v622
    %v641 = vmul.f32 %v590, %v626
    %v642 = vmul.f32 %v590, %v630
    %v643 = vmul.f32 %v258, %v618
    %v644 = vmul.f32 %v258, %v622
    %v645 = vmul.f32 %v258, %v626
    %v646 = vmul.f32 %v258, %v630
    %v647 = vmul.f32 %v263, %v618
    %v648 = vmul.f32 %v263, %v622
    %v649 = vmul.f32 %v263, %v626
    %v650 = vmul.f32 %v263, %v630
    %v652 = vsel %vm88, %v635, 0
    %v655 = vsel %vm88, %v636, 0
    %v658 = vsel %vm88, %v637, 0
    %v661 = vsel %vm88, %v638, 0
    %v664 = vsel %vm88, %v589, 0
    %666 = vmatprep.subr.mxu0 0.0
    %667 = vmatpush1.xpose.msra.mxu0 %v664
    %668 = vmatprep.subr.mxu0 0.0
    %669 = vmatpush1.xpose.msra.mxu0 0.0
    %670 = vmatprep.subr.mxu0 0.0
    %671 = vmatpush1.xpose.msra.mxu0 0.0
    %672 = vmatprep.subr.mxu0 0.0
    %673 = vmatpush1.xpose.msra.mxu0 0.0
    %674 = vmatprep.subr.mxu0 0.0
    %675 = vmatpush1.xpose.msra.mxu0 0.0
    %676 = vmatprep.subr.mxu0 0.0
    %677 = vmatpush1.xpose.msra.mxu0 0.0
    %678 = vmatprep.subr.mxu0 0.0
    %679 = vmatpush1.xpose.msra.mxu0 0.0
    %680 = vmatprep.subr.mxu0 0.0
    %681 = vmatpush1.xpose.msra.mxu0 0.0
    %682 = vmatprep.subr.mxu0 0.0
    %683 = vmatpush1.xpose.msra.mxu0 0.0
    %684 = vmatprep.subr.mxu0 0.0
    %685 = vmatpush1.xpose.msra.mxu0 0.0
    %686 = vmatprep.subr.mxu0 0.0
    %687 = vmatpush1.xpose.msra.mxu0 0.0
    %688 = vmatprep.subr.mxu0 0.0
    %689 = vmatpush1.xpose.msra.mxu0 0.0
    %690 = vmatprep.subr.mxu0 0.0
    %691 = vmatpush1.xpose.msra.mxu0 0.0
    %692 = vmatprep.subr.mxu0 0.0
    %693 = vmatpush1.xpose.msra.mxu0 0.0
    %694 = vmatprep.subr.mxu0 0.0
    %695 = vmatpush1.xpose.msra.mxu0 0.0
    %696 = vmatprep.subr.mxu0 0.0
    %697 = vmatpush1.xpose.msra.mxu0 0.0
    %698 = vmatprep.subr.mxu0 0.0
    %699 = vmatpush1.xpose.msra.mxu0 0.0
    %700 = vmatprep.subr.mxu0 0.0
    %701 = vmatpush1.xpose.msra.mxu0 0.0
    %702 = vmatprep.subr.mxu0 0.0
    %703 = vmatpush1.xpose.msra.mxu0 0.0
    %704 = vmatprep.subr.mxu0 0.0
    %705 = vmatpush1.xpose.msra.mxu0 0.0
    %706 = vmatprep.subr.mxu0 0.0
    %707 = vmatpush1.xpose.msra.mxu0 0.0
    %708 = vmatprep.subr.mxu0 0.0
    %709 = vmatpush1.xpose.msra.mxu0 0.0
    %710 = vmatprep.subr.mxu0 0.0
    %711 = vmatpush1.xpose.msra.mxu0 0.0
    %712 = vmatprep.subr.mxu0 0.0
    %713 = vmatpush1.xpose.msra.mxu0 0.0
    %714 = vmatprep.subr.mxu0 0.0
    %715 = vmatpush1.xpose.msra.mxu0 0.0
    %716 = vmatprep.subr.mxu0 0.0
    %717 = vmatpush1.xpose.msra.mxu0 0.0
    %718 = vmatprep.subr.mxu0 0.0
    %719 = vmatpush1.xpose.msra.mxu0 0.0
    %720 = vmatprep.subr.mxu0 0.0
    %721 = vmatpush1.xpose.msra.mxu0 0.0
    %722 = vmatprep.subr.mxu0 0.0
    %723 = vmatpush1.xpose.msra.mxu0 0.0
    %724 = vmatprep.subr.mxu0 0.0
    %725 = vmatpush1.xpose.msra.mxu0 0.0
    %726 = vmatprep.subr.mxu0 0.0
    %727 = vmatpush1.xpose.msra.mxu0 0.0
    %728 = vmatprep.subr.mxu0 0.0
    %729 = vmatpush1.xpose.msra.mxu0 0.0
    %730 = vmatprep.mubr.f32.mxu0 0.0
    %731 = vmatmul.mubr.f32.gmra.mrb[0].mxu0 %v652
    %v732 = vpop.f32.mrb[0].mxu0
    %v733 = vadd.f32 0.0, %v732
    %v734 = vpop.f32.mrb[0].mxu0
    %735 = vmatprep.mubr.f32.mxu0 0.0
    %736 = vmatmul.mubr.f32.gmra.mrb[0].mxu0 %v655
    %v737 = vpop.f32.mrb[0].mxu0
    %v738 = vadd.f32 0.0, %v737
    %v739 = vpop.f32.mrb[0].mxu0
    %740 = vmatprep.mubr.f32.mxu0 0.0
    %741 = vmatmul.mubr.f32.gmra.mrb[0].mxu0 %v658
    %v742 = vpop.f32.mrb[0].mxu0
    %v743 = vadd.f32 0.0, %v742
    %v744 = vpop.f32.mrb[0].mxu0
    %745 = vmatprep.mubr.f32.mxu0 0.0
    %746 = vmatmul.mubr.f32.gmra.mrb[0].mxu0 %v661
    %v747 = vpop.f32.mrb[0].mxu0
    %v748 = vadd.f32 0.0, %v747
    %v749 = vpop.f32.mrb[0].mxu0
    %750 = vdwg.mxu0
    %v752 = vsel %vm88, %v639, 0
    %v755 = vsel %vm88, %v640, 0
    %v758 = vsel %vm88, %v641, 0
    %v761 = vsel %vm88, %v642, 0
    %v764 = vsel %vm88, %v590, 0
    %766 = vmatprep.subr.mxu0 0.0
    %767 = vmatpush1.xpose.msra.mxu0 %v764
    %768 = vmatprep.subr.mxu0 0.0
    %769 = vmatpush1.xpose.msra.mxu0 0.0
    %770 = vmatprep.subr.mxu0 0.0
    %771 = vmatpush1.xpose.msra.mxu0 0.0
    %772 = vmatprep.subr.mxu0 0.0
    %773 = vmatpush1.xpose.msra.mxu0 0.0
    %774 = vmatprep.subr.mxu0 0.0
    %775 = vmatpush1.xpose.msra.mxu0 0.0
    %776 = vmatprep.subr.mxu0 0.0
    %777 = vmatpush1.xpose.msra.mxu0 0.0
    %778 = vmatprep.subr.mxu0 0.0
    %779 = vmatpush1.xpose.msra.mxu0 0.0
    %780 = vmatprep.subr.mxu0 0.0
    %781 = vmatpush1.xpose.msra.mxu0 0.0
    %782 = vmatprep.subr.mxu0 0.0
    %783 = vmatpush1.xpose.msra.mxu0 0.0
    %784 = vmatprep.subr.mxu0 0.0
    %785 = vmatpush1.xpose.msra.mxu0 0.0
    %786 = vmatprep.subr.mxu0 0.0
    %787 = vmatpush1.xpose.msra.mxu0 0.0
    %788 = vmatprep.subr.mxu0 0.0
    %789 = vmatpush1.xpose.msra.mxu0 0.0
    %790 = vmatprep.subr.mxu0 0.0
    %791 = vmatpush1.xpose.msra.mxu0 0.0
    %792 = vmatprep.subr.mxu0 0.0
    %793 = vmatpush1.xpose.msra.mxu0 0.0
    %794 = vmatprep.subr.mxu0 0.0
    %795 = vmatpush1.xpose.msra.mxu0 0.0
    %796 = vmatprep.subr.mxu0 0.0
    %797 = vmatpush1.xpose.msra.mxu0 0.0
    %798 = vmatprep.subr.mxu0 0.0
    %799 = vmatpush1.xpose.msra.mxu0 0.0
    %800 = vmatprep.subr.mxu0 0.0
    %801 = vmatpush1.xpose.msra.mxu0 0.0
    %802 = vmatprep.subr.mxu0 0.0
    %803 = vmatpush1.xpose.msra.mxu0 0.0
    %804 = vmatprep.subr.mxu0 0.0
    %805 = vmatpush1.xpose.msra.mxu0 0.0
    %806 = vmatprep.subr.mxu0 0.0
    %807 = vmatpush1.xpose.msra.mxu0 0.0
    %808 = vmatprep.subr.mxu0 0.0
    %809 = vmatpush1.xpose.msra.mxu0 0.0
    %810 = vmatprep.subr.mxu0 0.0
    %811 = vmatpush1.xpose.msra.mxu0 0.0
    %812 = vmatprep.subr.mxu0 0.0
    %813 = vmatpush1.xpose.msra.mxu0 0.0
    %814 = vmatprep.subr.mxu0 0.0
    %815 = vmatpush1.xpose.msra.mxu0 0.0
    %816 = vmatprep.subr.mxu0 0.0
    %817 = vmatpush1.xpose.msra.mxu0 0.0
    %818 = vmatprep.subr.mxu0 0.0
    %819 = vmatpush1.xpose.msra.mxu0 0.0
    %820 = vmatprep.subr.mxu0 0.0
    %821 = vmatpush1.xpose.msra.mxu0 0.0
    %822 = vmatprep.subr.mxu0 0.0
    %823 = vmatpush1.xpose.msra.mxu0 0.0
    %824 = vmatprep.subr.mxu0 0.0
    %825 = vmatpush1.xpose.msra.mxu0 0.0
    %826 = vmatprep.subr.mxu0 0.0
    %827 = vmatpush1.xpose.msra.mxu0 0.0
    %828 = vmatprep.subr.mxu0 0.0
    %829 = vmatpush1.xpose.msra.mxu0 0.0
    %830 = vmatprep.mubr.f32.mxu0 0.0
    %831 = vmatmul.mubr.f32.gmra.mrb[0].mxu0 %v752
    %v832 = vpop.f32.mrb[0].mxu0
    %v833 = vadd.f32 0.0, %v832
    %v834 = vpop.f32.mrb[0].mxu0
    %835 = vmatprep.mubr.f32.mxu0 0.0
    %836 = vmatmul.mubr.f32.gmra.mrb[0].mxu0 %v755
    %v837 = vpop.f32.mrb[0].mxu0
    %v838 = vadd.f32 0.0, %v837
    %v839 = vpop.f32.mrb[0].mxu0
    %840 = vmatprep.mubr.f32.mxu0 0.0
    %841 = vmatmul.mubr.f32.gmra.mrb[0].mxu0 %v758
    %v842 = vpop.f32.mrb[0].mxu0
    %v843 = vadd.f32 0.0, %v842
    %v844 = vpop.f32.mrb[0].mxu0
    %845 = vmatprep.mubr.f32.mxu0 0.0
    %846 = vmatmul.mubr.f32.gmra.mrb[0].mxu0 %v761
    %v847 = vpop.f32.mrb[0].mxu0
    %v848 = vadd.f32 0.0, %v847
    %v849 = vpop.f32.mrb[0].mxu0
    %850 = vdwg.mxu0
    %v852 = vsel %vm88, %v643, 0
    %v855 = vsel %vm88, %v644, 0
    %v858 = vsel %vm88, %v645, 0
    %v861 = vsel %vm88, %v646, 0
    %v864 = vsel %vm88, %v348, 0
    %866 = vmatprep.subr.mxu0 0.0
    %867 = vmatpush1.xpose.msra.mxu0 %v864
    %868 = vmatprep.subr.mxu0 0.0
    %869 = vmatpush1.xpose.msra.mxu0 0.0
    %870 = vmatprep.subr.mxu0 0.0
    %871 = vmatpush1.xpose.msra.mxu0 0.0
    %872 = vmatprep.subr.mxu0 0.0
    %873 = vmatpush1.xpose.msra.mxu0 0.0
    %874 = vmatprep.subr.mxu0 0.0
    %875 = vmatpush1.xpose.msra.mxu0 0.0
    %876 = vmatprep.subr.mxu0 0.0
    %877 = vmatpush1.xpose.msra.mxu0 0.0
    %878 = vmatprep.subr.mxu0 0.0
    %879 = vmatpush1.xpose.msra.mxu0 0.0
    %880 = vmatprep.subr.mxu0 0.0
    %881 = vmatpush1.xpose.msra.mxu0 0.0
    %882 = vmatprep.subr.mxu0 0.0
    %883 = vmatpush1.xpose.msra.mxu0 0.0
    %884 = vmatprep.subr.mxu0 0.0
    %885 = vmatpush1.xpose.msra.mxu0 0.0
    %886 = vmatprep.subr.mxu0 0.0
    %887 = vmatpush1.xpose.msra.mxu0 0.0
    %888 = vmatprep.subr.mxu0 0.0
    %889 = vmatpush1.xpose.msra.mxu0 0.0
    %890 = vmatprep.subr.mxu0 0.0
    %891 = vmatpush1.xpose.msra.mxu0 0.0
    %892 = vmatprep.subr.mxu0 0.0
    %893 = vmatpush1.xpose.msra.mxu0 0.0
    %894 = vmatprep.subr.mxu0 0.0
    %895 = vmatpush1.xpose.msra.mxu0 0.0
    %896 = vmatprep.subr.mxu0 0.0
    %897 = vmatpush1.xpose.msra.mxu0 0.0
    %898 = vmatprep.subr.mxu0 0.0
    %899 = vmatpush1.xpose.msra.mxu0 0.0
    %900 = vmatprep.subr.mxu0 0.0
    %901 = vmatpush1.xpose.msra.mxu0 0.0
    %902 = vmatprep.subr.mxu0 0.0
    %903 = vmatpush1.xpose.msra.mxu0 0.0
    %904 = vmatprep.subr.mxu0 0.0
    %905 = vmatpush1.xpose.msra.mxu0 0.0
    %906 = vmatprep.subr.mxu0 0.0
    %907 = vmatpush1.xpose.msra.mxu0 0.0
    %908 = vmatprep.subr.mxu0 0.0
    %909 = vmatpush1.xpose.msra.mxu0 0.0
    %910 = vmatprep.subr.mxu0 0.0
    %911 = vmatpush1.xpose.msra.mxu0 0.0
    %912 = vmatprep.subr.mxu0 0.0
    %913 = vmatpush1.xpose.msra.mxu0 0.0
    %914 = vmatprep.subr.mxu0 0.0
    %915 = vmatpush1.xpose.msra.mxu0 0.0
    %916 = vmatprep.subr.mxu0 0.0
    %917 = vmatpush1.xpose.msra.mxu0 0.0
    %918 = vmatprep.subr.mxu0 0.0
    %919 = vmatpush1.xpose.msra.mxu0 0.0
    %920 = vmatprep.subr.mxu0 0.0
    %921 = vmatpush1.xpose.msra.mxu0 0.0
    %922 = vmatprep.subr.mxu0 0.0
    %923 = vmatpush1.xpose.msra.mxu0 0.0
    %924 = vmatprep.subr.mxu0 0.0
    %925 = vmatpush1.xpose.msra.mxu0 0.0
    %926 = vmatprep.subr.mxu0 0.0
    %927 = vmatpush1.xpose.msra.mxu0 0.0
    %928 = vmatprep.subr.mxu0 0.0
    %929 = vmatpush1.xpose.msra.mxu0 0.0
    %930 = vmatprep.mubr.f32.mxu0 0.0
    %931 = vmatmul.mubr.f32.gmra.mrb[0].mxu0 %v852
    %v932 = vpop.f32.mrb[0].mxu0
    %v933 = vadd.f32 0.0, %v932
    %v934 = vpop.f32.mrb[0].mxu0
    %935 = vmatprep.mubr.f32.mxu0 0.0
    %936 = vmatmul.mubr.f32.gmra.mrb[0].mxu0 %v855
    %v937 = vpop.f32.mrb[0].mxu0
    %v938 = vadd.f32 0.0, %v937
    %v939 = vpop.f32.mrb[0].mxu0
    %940 = vmatprep.mubr.f32.mxu0 0.0
    %941 = vmatmul.mubr.f32.gmra.mrb[0].mxu0 %v858
    %v942 = vpop.f32.mrb[0].mxu0
    %v943 = vadd.f32 0.0, %v942
    %v944 = vpop.f32.mrb[0].mxu0
    %945 = vmatprep.mubr.f32.mxu0 0.0
    %946 = vmatmul.mubr.f32.gmra.mrb[0].mxu0 %v861
    %v947 = vpop.f32.mrb[0].mxu0
    %v948 = vadd.f32 0.0, %v947
    %v949 = vpop.f32.mrb[0].mxu0
    %950 = vdwg.mxu0
    %v952 = vsel %vm88, %v647, 0
    %v955 = vsel %vm88, %v648, 0
    %v958 = vsel %vm88, %v649, 0
    %v961 = vsel %vm88, %v650, 0
    %v964 = vsel %vm88, %v353, 0
    %966 = vmatprep.subr.mxu0 0.0
    %967 = vmatpush1.xpose.msra.mxu0 %v964
    %968 = vmatprep.subr.mxu0 0.0
    %969 = vmatpush1.xpose.msra.mxu0 0.0
    %970 = vmatprep.subr.mxu0 0.0
    %971 = vmatpush1.xpose.msra.mxu0 0.0
    %972 = vmatprep.subr.mxu0 0.0
    %973 = vmatpush1.xpose.msra.mxu0 0.0
    %974 = vmatprep.subr.mxu0 0.0
    %975 = vmatpush1.xpose.msra.mxu0 0.0
    %976 = vmatprep.subr.mxu0 0.0
    %977 = vmatpush1.xpose.msra.mxu0 0.0
    %978 = vmatprep.subr.mxu0 0.0
    %979 = vmatpush1.xpose.msra.mxu0 0.0
    %980 = vmatprep.subr.mxu0 0.0
    %981 = vmatpush1.xpose.msra.mxu0 0.0
    %982 = vmatprep.subr.mxu0 0.0
    %983 = vmatpush1.xpose.msra.mxu0 0.0
    %984 = vmatprep.subr.mxu0 0.0
    %985 = vmatpush1.xpose.msra.mxu0 0.0
    %986 = vmatprep.subr.mxu0 0.0
    %987 = vmatpush1.xpose.msra.mxu0 0.0
    %988 = vmatprep.subr.mxu0 0.0
    %989 = vmatpush1.xpose.msra.mxu0 0.0
    %990 = vmatprep.subr.mxu0 0.0
    %991 = vmatpush1.xpose.msra.mxu0 0.0
    %992 = vmatprep.subr.mxu0 0.0
    %993 = vmatpush1.xpose.msra.mxu0 0.0
    %994 = vmatprep.subr.mxu0 0.0
    %995 = vmatpush1.xpose.msra.mxu0 0.0
    %996 = vmatprep.subr.mxu0 0.0
    %997 = vmatpush1.xpose.msra.mxu0 0.0
    %998 = vmatprep.subr.mxu0 0.0
    %999 = vmatpush1.xpose.msra.mxu0 0.0
    %1000 = vmatprep.subr.mxu0 0.0
    %1001 = vmatpush1.xpose.msra.mxu0 0.0
    %1002 = vmatprep.subr.mxu0 0.0
    %1003 = vmatpush1.xpose.msra.mxu0 0.0
    %1004 = vmatprep.subr.mxu0 0.0
    %1005 = vmatpush1.xpose.msra.mxu0 0.0
    %1006 = vmatprep.subr.mxu0 0.0
    %1007 = vmatpush1.xpose.msra.mxu0 0.0
    %1008 = vmatprep.subr.mxu0 0.0
    %1009 = vmatpush1.xpose.msra.mxu0 0.0
    %1010 = vmatprep.subr.mxu0 0.0
    %1011 = vmatpush1.xpose.msra.mxu0 0.0
    %1012 = vmatprep.subr.mxu0 0.0
    %1013 = vmatpush1.xpose.msra.mxu0 0.0
    %1014 = vmatprep.subr.mxu0 0.0
    %1015 = vmatpush1.xpose.msra.mxu0 0.0
    %1016 = vmatprep.subr.mxu0 0.0
    %1017 = vmatpush1.xpose.msra.mxu0 0.0
    %1018 = vmatprep.subr.mxu0 0.0
    %1019 = vmatpush1.xpose.msra.mxu0 0.0
    %1020 = vmatprep.subr.mxu0 0.0
    %1021 = vmatpush1.xpose.msra.mxu0 0.0
    %1022 = vmatprep.subr.mxu0 0.0
    %1023 = vmatpush1.xpose.msra.mxu0 0.0
    %1024 = vmatprep.subr.mxu0 0.0
    %1025 = vmatpush1.xpose.msra.mxu0 0.0
    %1026 = vmatprep.subr.mxu0 0.0
    %1027 = vmatpush1.xpose.msra.mxu0 0.0
    %1028 = vmatprep.subr.mxu0 0.0
    %1029 = vmatpush1.xpose.msra.mxu0 0.0
    %1030 = vmatprep.mubr.f32.mxu0 0.0
    %1031 = vmatmul.mubr.f32.gmra.mrb[0].mxu0 %v952
    %v1032 = vpop.f32.mrb[0].mxu0
    %v1033 = vadd.f32 0.0, %v1032
    %v1034 = vpop.f32.mrb[0].mxu0
    %1035 = vmatprep.mubr.f32.mxu0 0.0
    %1036 = vmatmul.mubr.f32.gmra.mrb[0].mxu0 %v955
    %v1037 = vpop.f32.mrb[0].mxu0
    %v1038 = vadd.f32 0.0, %v1037
    %v1039 = vpop.f32.mrb[0].mxu0
    %1040 = vmatprep.mubr.f32.mxu0 0.0
    %1041 = vmatmul.mubr.f32.gmra.mrb[0].mxu0 %v958
    %v1042 = vpop.f32.mrb[0].mxu0
    %v1043 = vadd.f32 0.0, %v1042
    %v1044 = vpop.f32.mrb[0].mxu0
    %1045 = vmatprep.mubr.f32.mxu0 0.0
    %1046 = vmatmul.mubr.f32.gmra.mrb[0].mxu0 %v961
    %v1047 = vpop.f32.mrb[0].mxu0
    %v1048 = vadd.f32 0.0, %v1047
    %v1049 = vpop.f32.mrb[0].mxu0
    %1050 = vdwg.mxu0
    %v1051 = vmul.f32 %v933, 0.25
    %v1052 = vmul.f32 %v938, 0.25
    %v1053 = vmul.f32 %v943, 0.25
    %v1054 = vmul.f32 %v948, 0.25
    %v1055 = vmul.f32 %v1033, 0.25
    %v1056 = vmul.f32 %v1038, 0.25
    %v1057 = vmul.f32 %v1043, 0.25
    %v1058 = vmul.f32 %v1048, 0.25
    %v1059 = vld [vmem:[%s1] sm:$0x3]
    %v1060 = vld [vmem:[%s1 + $0x2] sm:$0x3]
    %v1061 = vunpack.c.0.s8 %v1059
    %v1062 = vunpack.c.0.s8 %v1060
    %v1063 = vcvt.s32.f32 %v1061
    %v1064 = vcvt.s32.f32 %v1062
    %vm1065 = vcmp.gt.f32.partialorder %v1063, 0.5
    %vm1066 = vcmp.gt.f32.partialorder %v1064, 0.5
    %v1067 = vsel %vm1065, 0.0, %v733
    %v1068 = vsel %vm1065, 0.0, %v738
    %v1069 = vsel %vm1065, 0.0, %v743
    %v1070 = vsel %vm1065, 0.0, %v748
    %v1071 = vsel %vm1066, 0.0, %v833
    %v1072 = vsel %vm1066, 0.0, %v838
    %v1073 = vsel %vm1066, 0.0, %v843
    %v1074 = vsel %vm1066, 0.0, %v848
    %vm1075 = vcmp.gt.f32.partialorder %v1067, 0.1
    %vm1076 = vcmp.gt.f32.partialorder %v1068, 0.1
    %vm1077 = vcmp.gt.f32.partialorder %v1069, 0.1
    %vm1078 = vcmp.gt.f32.partialorder %v1070, 0.1
    %vm1079 = vcmp.gt.f32.partialorder %v1071, 0.1
    %vm1080 = vcmp.gt.f32.partialorder %v1072, 0.1
    %vm1081 = vcmp.gt.f32.partialorder %v1073, 0.1
    %vm1082 = vcmp.gt.f32.partialorder %v1074, 0.1
    %v1083 = vsel %vm1075, 1, 0
    %v1084 = vsel %vm1076, 1, 0
    %v1085 = vsel %vm1077, 1, 0
    %v1086 = vsel %vm1078, 1, 0
    %v1087 = vsel %vm1079, 1, 0
    %v1088 = vsel %vm1080, 1, 0
    %v1089 = vsel %vm1081, 1, 0
    %v1090 = vsel %vm1082, 1, 0
    %v1091 = vcvt.s32.f32 %v1083
    %v1092 = vcvt.s32.f32 %v1084
    %v1093 = vcvt.s32.f32 %v1085
    %v1094 = vcvt.s32.f32 %v1086
    %v1095 = vcvt.s32.f32 %v1087
    %v1096 = vcvt.s32.f32 %v1088
    %v1097 = vcvt.s32.f32 %v1089
    %v1098 = vcvt.s32.f32 %v1090
    %v1099 = vsel %vm1065, -1e+10, %v1051
    %v1100 = vsel %vm1065, -1e+10, %v1052
    %v1101 = vsel %vm1065, -1e+10, %v1053
    %v1102 = vsel %vm1065, -1e+10, %v1054
    %v1103 = vsel %vm1066, -1e+10, %v1055
    %v1104 = vsel %vm1066, -1e+10, %v1056
    %v1105 = vsel %vm1066, -1e+10, %v1057
    %v1106 = vsel %vm1066, -1e+10, %v1058
    %vm1107 = vcmask 64512
    %v1108 = vsel %vm1107, %v1099, -inf
    %1109 = vmax.xlane.f32.xlu0 %v1108
    %v1110 = vpop.xlane.xlu0 %1109
    %v1111 = vsel %vm1107, %v1100, -inf
    %1112 = vmax.xlane.f32.xlu0 %v1111
    %v1113 = vpop.xlane.xlu0 %1112
    %v1114 = vsel %vm1107, %v1101, -inf
    %1115 = vmax.xlane.f32.xlu0 %v1114
    %v1116 = vpop.xlane.xlu0 %1115
    %v1117 = vsel %vm1107, %v1102, -inf
    %1118 = vmax.xlane.f32.xlu0 %v1117
    %v1119 = vpop.xlane.xlu0 %1118
    %v1120 = vsel %vm1107, %v1103, -inf
    %1121 = vmax.xlane.f32.xlu0 %v1120
    %v1122 = vpop.xlane.xlu0 %1121
    %v1123 = vsel %vm1107, %v1104, -inf
    %1124 = vmax.xlane.f32.xlu0 %v1123
    %v1125 = vpop.xlane.xlu0 %1124
    %v1126 = vsel %vm1107, %v1105, -inf
    %1127 = vmax.xlane.f32.xlu0 %v1126
    %v1128 = vpop.xlane.xlu0 %1127
    %v1129 = vsel %vm1107, %v1106, -inf
    %1130 = vmax.xlane.f32.xlu0 %v1129
    %v1131 = vpop.xlane.xlu0 %1130
    %v1132 = vsub.f32 %v1099, %v1110
    %v1133 = vsub.f32 %v1100, %v1113
    %v1134 = vsub.f32 %v1101, %v1116
    %v1135 = vsub.f32 %v1102, %v1119
    %v1136 = vsub.f32 %v1103, %v1122
    %v1137 = vsub.f32 %v1104, %v1125
    %v1138 = vsub.f32 %v1105, %v1128
    %v1139 = vsub.f32 %v1106, %v1131
    %v1140 = vmul.f32 %v1132, 1.442695
    %v1141 = vpow.pop %v1140
    %v1142 = vmul.f32 %v1133, 1.442695
    %v1143 = vpow.pop %v1142
    %v1144 = vmul.f32 %v1134, 1.442695
    %v1145 = vpow.pop %v1144
    %v1146 = vmul.f32 %v1135, 1.442695
    %v1147 = vpow.pop %v1146
    %v1148 = vmul.f32 %v1136, 1.442695
    %v1149 = vpow.pop %v1148
    %v1150 = vmul.f32 %v1137, 1.442695
    %v1151 = vpow.pop %v1150
    %v1152 = vmul.f32 %v1138, 1.442695
    %v1153 = vpow.pop %v1152
    %v1154 = vmul.f32 %v1139, 1.442695
    %v1155 = vpow.pop %v1154
    %v1156 = vsel %vm1107, %v1141, 0.0
    %1157 = vadd.xlane.f32.xlu0 %v1156
    %v1158 = vpop.xlane.xlu0 %1157
    %v1159 = vsel %vm1107, %v1143, 0.0
    %1160 = vadd.xlane.f32.xlu0 %v1159
    %v1161 = vpop.xlane.xlu0 %1160
    %v1162 = vsel %vm1107, %v1145, 0.0
    %1163 = vadd.xlane.f32.xlu0 %v1162
    %v1164 = vpop.xlane.xlu0 %1163
    %v1165 = vsel %vm1107, %v1147, 0.0
    %1166 = vadd.xlane.f32.xlu0 %v1165
    %v1167 = vpop.xlane.xlu0 %1166
    %v1168 = vsel %vm1107, %v1149, 0.0
    %1169 = vadd.xlane.f32.xlu0 %v1168
    %v1170 = vpop.xlane.xlu0 %1169
    %v1171 = vsel %vm1107, %v1151, 0.0
    %1172 = vadd.xlane.f32.xlu0 %v1171
    %v1173 = vpop.xlane.xlu0 %1172
    %v1174 = vsel %vm1107, %v1153, 0.0
    %1175 = vadd.xlane.f32.xlu0 %v1174
    %v1176 = vpop.xlane.xlu0 %1175
    %v1177 = vsel %vm1107, %v1155, 0.0
    %1178 = vadd.xlane.f32.xlu0 %v1177
    %v1179 = vpop.xlane.xlu0 %1178
    %v1180 = vrcp.pop %v1158
    %v1181 = vrcp.pop %v1161
    %v1182 = vrcp.pop %v1164
    %v1183 = vrcp.pop %v1167
    %v1184 = vrcp.pop %v1170
    %v1185 = vrcp.pop %v1173
    %v1186 = vrcp.pop %v1176
    %v1187 = vrcp.pop %v1179
    %v1188 = vmul.f32 %v1141, %v1180
    %v1189 = vmul.f32 %v1143, %v1181
    %v1190 = vmul.f32 %v1145, %v1182
    %v1191 = vmul.f32 %v1147, %v1183
    %v1192 = vmul.f32 %v1149, %v1184
    %v1193 = vmul.f32 %v1151, %v1185
    %v1194 = vmul.f32 %v1153, %v1186
    %v1195 = vmul.f32 %v1155, %v1187
    %v1196 = vsub.f32 1.0, %v1063
    %v1197 = vsub.f32 1.0, %v1064
    %1199 = vset.pattern.permute.xlu0 0
    %1200 = vperm.xlu0 %1199, %v1196
    %v1201 = vpop.permute.xlu0 %1200
    %1204 = vset.pattern.permute.xlu0 0
    %1205 = vperm.xlu0 %1204, %v1197
    %v1206 = vpop.permute.xlu0 %1205
    %v1208 = vmul.f32 %v1188, %v1201
    %v1209 = vmul.f32 %v1189, %v1201
    %v1210 = vmul.f32 %v1190, %v1201
    %v1211 = vmul.f32 %v1191, %v1201
    %v1212 = vmul.f32 %v1192, %v1206
    %v1213 = vmul.f32 %v1193, %v1206
    %v1214 = vmul.f32 %v1194, %v1206
    %v1215 = vmul.f32 %v1195, %v1206
    %v1216 = vmul.f32 %v1091, %v1208
    %v1217 = vmul.f32 %v1092, %v1209
    %v1218 = vmul.f32 %v1093, %v1210
    %v1219 = vmul.f32 %v1094, %v1211
    %v1220 = vmul.f32 %v1095, %v1212
    %v1221 = vmul.f32 %v1096, %v1213
    %v1222 = vmul.f32 %v1097, %v1214
    %v1223 = vmul.f32 %v1098, %v1215
    %1224 = vst.msk [vmem:[#allocation8] sm:$0xff] %vm1107, %v1216
    %1225 = vst.msk [vmem:[#allocation8 + $0x8] sm:$0xff] %vm1107, %v1217
    %1226 = vst.msk [vmem:[#allocation8 + $0x10] sm:$0xff] %vm1107, %v1218
    %1227 = vst.msk [vmem:[#allocation8 + $0x18] sm:$0xff] %vm1107, %v1219
    %1228 = vst.msk [vmem:[#allocation8 + $0x20] sm:$0xff] %vm1107, %v1220
    %1229 = vst.msk [vmem:[#allocation8 + $0x28] sm:$0xff] %vm1107, %v1221
    %1230 = vst.msk [vmem:[#allocation8 + $0x30] sm:$0xff] %vm1107, %v1222
    %1231 = vst.msk [vmem:[#allocation8 + $0x38] sm:$0xff] %vm1107, %v1223
    // Predicated region
    $region46: #{khead_attn_cos_similarity.1} parent=1 // pred_check
      _
    $region47: #{khead_attn_cos_similarity.1} parent=1 // pred_check_branch
      %1233 = sbr.rel (0) target = $region49
    $region48: #{khead_attn_cos_similarity.1} parent=1 // pred_region
      %s1235 = ssub.s32 1024, 1024
      %1236 = vsyncadd [#allocation4], %s1235
      %s1237 = sshll.u32 [#allocation8], 4
      %s1238 = int_to_ptr.vmem [resolvable:$true] %s1237
      %1243 = dma.vmem_to_hbm [thread:$0]  %s1238, 1024, %s8, [#allocation4], 128, 128, 8
    $region49: #{khead_attn_cos_similarity.1} parent=1 // pred_fallthru
      _
    // Predicated region
    $region50: #{khead_attn_cos_similarity.1} parent=1 // pred_check
      _
    $region51: #{khead_attn_cos_similarity.1} parent=1 // pred_check_branch
      %1245 = sbr.rel (0) target = $region53
    $region52: #{khead_attn_cos_similarity.1} parent=1 // pred_region
      %1246 = dma.done [#allocation4], 1024
    $region53: #{khead_attn_cos_similarity.1} parent=1 // pred_fallthru
      _
    %1247 = vsyncpa [#allocation3], 1
    %1248 = vsyncpa [#allocation6], 1
    %1249 = vsyncpa [#allocation4], 1

</llo_original>
